<compile_context>
chip_gen: v7x
topology: tpu7x:2x2x1
jax: 0.10.0
libtpu: 0.0.40
codegen_flags: <defaults>
</compile_context>

<pallas_src>
import jax
import jax.numpy as jnp
from jax import lax
from jax.experimental import pallas as pl
from jax.experimental.pallas import tpu as pltpu


def _ghost_conv_kernel(w1_ref, b1_ref, w2_ref, b2_ref,   # scalar-prefetch args (SMEM)
                       x_ref,                            # (1, C1, H, W) VMEM block
                       o_ref,                            # (1, 2*C_, H, W) VMEM block
                       ypad_ref):                        # (C_, H+4, W+4) f32 VMEM scratch
    _, C1, H, W = x_ref.shape
    C_ = o_ref.shape[1] // 2

    x = x_ref[0].astype(jnp.float32)                     # (C1, H, W), loaded once

    # Zero the padded scratch; only the interior is overwritten below, so the
    # 2-pixel border stays zero (== Conv2d padding=2).
    ypad_ref[...] = jnp.zeros(ypad_ref.shape, jnp.float32)

    # ---- cv1: 1x1 conv (BN scale folded into weights) + bias + SiLU -------------
    # Per output channel: C1 scalar-broadcast FMAs over the (H, W) slab (VPU).
    for co in range(C_):
        acc = jnp.zeros((H, W), jnp.float32)
        for ci in range(C1):
            acc = acc + x[ci] * w1_ref[ci * C_ + co]
        z = acc + b1_ref[co]                              # folded BatchNorm bias
        y_co = z * jax.nn.sigmoid(z)                      # SiLU
        o_ref[0, co, :, :] = y_co.astype(o_ref.dtype)     # first half of the concat
        ypad_ref[co, 2:2 + H, 2:2 + W] = y_co             # interior of padded copy

    # ---- cv2: 5x5 depthwise conv (pad=2) + bias + SiLU ---------------------------
    for co in range(C_):
        acc = jnp.zeros((H, W), jnp.float32)
        for i in range(5):                                # 25 taps, static unroll
            for j in range(5):
                acc = acc + (ypad_ref[co, i:i + H, j:j + W]
                             * w2_ref[co * 25 + i * 5 + j])
        z = acc + b2_ref[co]                              # folded BatchNorm bias
        o_ref[0, C_ + co, :, :] = (z * jax.nn.sigmoid(z)).astype(o_ref.dtype)


def ghost_conv(x_nchw, w1_flat, b1, w2_flat, b2, c_):
    """Fused GhostConv forward.  x_nchw: (N, C1, H, W) -> (N, 2*c_, H, W)."""
    N, C1, H, W = x_nchw.shape

    grid_spec = pltpu.PrefetchScalarGridSpec(
        num_scalar_prefetch=4,                 # w1_flat, b1, w2_flat, b2 -> SMEM
        grid=(N,),                             # one image per grid step (pipelined)
        in_specs=[
            pl.BlockSpec((1, C1, H, W), lambda n, *prefetch: (n, 0, 0, 0)),
        ],
        out_specs=pl.BlockSpec((1, 2 * c_, H, W), lambda n, *prefetch: (n, 0, 0, 0)),
        scratch_shapes=[pltpu.VMEM((c_, H + 4, W + 4), jnp.float32)],
    )

    # VMEM/step: 2x input block + 2x output block (double-buffered) + padded scratch
    # = (2*C1 + 4*c_)*H*W*4 + c_*(H+4)*(W+4)*4 bytes — a few tens of KiB here and
    # well under v7x's 64 MiB physical VMEM for realistic YOLO layer sizes.
    return pl.pallas_call(
        _ghost_conv_kernel,
        out_shape=jax.ShapeDtypeStruct((N, 2 * c_, H, W), x_nchw.dtype),
        grid_spec=grid_spec,
        compiler_params=pltpu.CompilerParams(
            dimension_semantics=("parallel",),   # lets v7x shard the batch over 2 TCs
            vmem_limit_bytes=32 * 1024 * 1024,   # explicit, safe on v5e/v6e/v7x
        ),
    )(w1_flat, b1, w2_flat, b2, x_nchw)


def _reference(x_nchw, w_cv1, scale1, bias1, w_cv2, scale2, bias2, c_):
    """Pure-JAX reference mirroring the PyTorch forward (NCHW)."""
    def bn_silu(z, s, b):
        z = z * s[None, :, None, None] + b[None, :, None, None]
        return z * jax.nn.sigmoid(z)

    z1 = lax.conv_general_dilated(
        x_nchw, w_cv1, (1, 1), 'VALID',
        dimension_numbers=('NCHW', 'OIHW', 'NCHW'))
    y = bn_silu(z1, scale1, bias1)
    z2 = lax.conv_general_dilated(
        y, w_cv2, (1, 1), ((2, 2), (2, 2)),
        dimension_numbers=('NCHW', 'OIHW', 'NCHW'),
        feature_group_count=c_)
    y2 = bn_silu(z2, scale2, bias2)
    return jnp.concatenate([y, y2], axis=1)


if __name__ == "__main__":
    # GhostConv(c1=4, c2=8), input (2, 4, 16, 16)
    N, c1, c2, H, W = 2, 4, 8, 16, 16
    c_ = c2 // 2
    eps = 1e-5

    key = jax.random.PRNGKey(0)
    ks = jax.random.split(key, 12)

    x = jax.random.normal(ks[0], (N, c1, H, W), jnp.float32)

    # cv1: Conv2d(c1, c_, 1, 1, bias=False) + BatchNorm2d(c_)
    w_cv1 = jax.random.normal(ks[1], (c_, c1, 1, 1), jnp.float32) * 0.2
    g1 = 1.0 + 0.1 * jax.random.normal(ks[2], (c_,), jnp.float32)
    b1 = 0.1 * jax.random.normal(ks[3], (c_,), jnp.float32)
    m1 = 0.1 * jax.random.normal(ks[4], (c_,), jnp.float32)
    v1 = jax.random.uniform(ks[5], (c_,), jnp.float32, 0.5, 1.5)
    scale1 = g1 / jnp.sqrt(v1 + eps)
    bias1 = b1 - m1 * scale1

    # cv2: Conv2d(c_, c_, 5, 1, pad=2, groups=c_, bias=False) + BatchNorm2d(c_)
    w_cv2 = jax.random.normal(ks[6], (c_, 1, 5, 5), jnp.float32) * 0.1
    g2 = 1.0 + 0.1 * jax.random.normal(ks[7], (c_,), jnp.float32)
    b2 = 0.1 * jax.random.normal(ks[8], (c_,), jnp.float32)
    m2 = 0.1 * jax.random.normal(ks[9], (c_,), jnp.float32)
    v2 = jax.random.uniform(ks[10], (c_,), jnp.float32, 0.5, 1.5)
    scale2 = g2 / jnp.sqrt(v2 + eps)
    bias2 = b2 - m2 * scale2

    # Host-side prep: fold BN scale into the conv weights, flatten for SMEM prefetch.
    w1_flat = jnp.transpose(w_cv1[:, :, 0, 0] * scale1[:, None], (1, 0)).reshape(-1)  # [ci*c_+co]
    w2_flat = (w_cv2[:, 0, :, :] * scale2[:, None, None]).reshape(-1)                 # [co*25+i*5+j]

    out = ghost_conv(x, w1_flat, bias1, w2_flat, bias2, c_)
    out = jax.block_until_ready(out)

    ref = _reference(x, w_cv1, scale1, bias1, w_cv2, scale2, bias2, c_)
    assert out.shape == (N, c2, H, W)
    max_err = float(jnp.max(jnp.abs(out - ref)))
    assert jnp.allclose(out, ref, atol=1e-4, rtol=1e-4), max_err

    print("KERNEL_OK")
</pallas_src>

<mosaic_0001>
module attributes {stable_mosaic.version = 11 : i64} {
  func.func @_ghost_conv_kernel(%arg0: i32, %arg1: memref<16xf32, #tpu.memory_space<smem>>, %arg2: memref<4xf32, #tpu.memory_space<smem>>, %arg3: memref<100xf32, #tpu.memory_space<smem>>, %arg4: memref<4xf32, #tpu.memory_space<smem>>, %arg5: memref<1x4x16x16xf32, #tpu.memory_space<vmem>>, %arg6: memref<1x8x16x16xf32, #tpu.memory_space<vmem>>, %arg7: memref<4x20x20xf32, #tpu.memory_space<vmem>>) attributes {dimension_semantics = [#tpu.dimension_semantics<parallel>], iteration_bounds = array<i64: 2>, scalar_prefetch = 4 : i64, scratch_operands = 1 : i64, tpu.core_type = #tpu.core_type<tc>, window_params = [{transform_indices = @transform_0, window_bounds = array<i64: 1, 4, 16, 16>}, {transform_indices = @transform_1, window_bounds = array<i64: 1, 8, 16, 16>}]} {
    %c0 = arith.constant 0 : index
    %c0_0 = arith.constant 0 : index
    %c0_1 = arith.constant 0 : index
    %c0_2 = arith.constant 0 : index
    %0 = vector.load %arg5[%c0, %c0_0, %c0_1, %c0_2] : memref<1x4x16x16xf32, #tpu.memory_space<vmem>>, vector<1x4x16x16xf32>
    %1 = vector.shape_cast %0 : vector<1x4x16x16xf32> to vector<4x16x16xf32>
    %cst = arith.constant 0.000000e+00 : f32
    %2 = vector.broadcast %cst : f32 to vector<4x20x20xf32>
    %c0_3 = arith.constant 0 : index
    %c0_4 = arith.constant 0 : index
    %c0_5 = arith.constant 0 : index
    %3 = vector.load %arg7[%c0_3, %c0_4, %c0_5] : memref<4x20x20xf32, #tpu.memory_space<vmem>>, vector<4x20x20xf32>
    tpu.vector_store %arg7[%c0_3, %c0_4, %c0_5], %2 {strides = array<i32>} : memref<4x20x20xf32, #tpu.memory_space<vmem>>, vector<4x20x20xf32>,
    %cst_6 = arith.constant 0.000000e+00 : f32
    %4 = vector.broadcast %cst_6 : f32 to vector<16x16xf32>
    %5 = vector.extract_strided_slice %1 {offsets = [0, 0, 0], sizes = [1, 16, 16], strides = [1, 1, 1]} : vector<4x16x16xf32> to vector<1x16x16xf32>
    %6 = vector.shape_cast %5 : vector<1x16x16xf32> to vector<16x16xf32>
    %c0_7 = arith.constant 0 : index
    %7 = memref.load %arg1[%c0_7] : memref<16xf32, #tpu.memory_space<smem>>
    %8 = vector.broadcast %7 : f32 to vector<16x16xf32>
    %9 = arith.mulf %6, %8 : vector<16x16xf32>
    %10 = arith.addf %4, %9 : vector<16x16xf32>
    %11 = vector.extract_strided_slice %1 {offsets = [1, 0, 0], sizes = [1, 16, 16], strides = [1, 1, 1]} : vector<4x16x16xf32> to vector<1x16x16xf32>
    %12 = vector.shape_cast %11 : vector<1x16x16xf32> to vector<16x16xf32>
    %c4 = arith.constant 4 : index
    %13 = memref.load %arg1[%c4] : memref<16xf32, #tpu.memory_space<smem>>
    %14 = vector.broadcast %13 : f32 to vector<16x16xf32>
    %15 = arith.mulf %12, %14 : vector<16x16xf32>
    %16 = arith.addf %10, %15 : vector<16x16xf32>
    %17 = vector.extract_strided_slice %1 {offsets = [2, 0, 0], sizes = [1, 16, 16], strides = [1, 1, 1]} : vector<4x16x16xf32> to vector<1x16x16xf32>
    %18 = vector.shape_cast %17 : vector<1x16x16xf32> to vector<16x16xf32>
    %c8 = arith.constant 8 : index
    %19 = memref.load %arg1[%c8] : memref<16xf32, #tpu.memory_space<smem>>
    %20 = vector.broadcast %19 : f32 to vector<16x16xf32>
    %21 = arith.mulf %18, %20 : vector<16x16xf32>
    %22 = arith.addf %16, %21 : vector<16x16xf32>
    %23 = vector.extract_strided_slice %1 {offsets = [3, 0, 0], sizes = [1, 16, 16], strides = [1, 1, 1]} : vector<4x16x16xf32> to vector<1x16x16xf32>
    %24 = vector.shape_cast %23 : vector<1x16x16xf32> to vector<16x16xf32>
    %c12 = arith.constant 12 : index
    %25 = memref.load %arg1[%c12] : memref<16xf32, #tpu.memory_space<smem>>
    %26 = vector.broadcast %25 : f32 to vector<16x16xf32>
    %27 = arith.mulf %24, %26 : vector<16x16xf32>
    %28 = arith.addf %22, %27 : vector<16x16xf32>
    %c0_8 = arith.constant 0 : index
    %29 = memref.load %arg2[%c0_8] : memref<4xf32, #tpu.memory_space<smem>>
    %30 = vector.broadcast %29 : f32 to vector<16x16xf32>
    %31 = arith.addf %28, %30 : vector<16x16xf32>
    %32 = arith.negf %31 : vector<16x16xf32>
    %33 = math.exp %32 : vector<16x16xf32>
    %cst_9 = arith.constant 1.000000e+00 : f32
    %34 = vector.broadcast %cst_9 : f32 to vector<16x16xf32>
    %35 = arith.addf %34, %33 : vector<16x16xf32>
    %36 = arith.divf %34, %35 : vector<16x16xf32>
    %37 = arith.mulf %31, %36 : vector<16x16xf32>
    %c0_10 = arith.constant 0 : index
    %c0_11 = arith.constant 0 : index
    %c0_12 = arith.constant 0 : index
    %c0_13 = arith.constant 0 : index
    %38 = vector.load %arg6[%c0_10, %c0_11, %c0_12, %c0_13] : memref<1x8x16x16xf32, #tpu.memory_space<vmem>>, vector<1x1x16x16xf32>
    %39 = vector.shape_cast %38 : vector<1x1x16x16xf32> to vector<16x16xf32>
    %40 = vector.shape_cast %37 : vector<16x16xf32> to vector<1x1x16x16xf32>
    tpu.vector_store %arg6[%c0_10, %c0_11, %c0_12, %c0_13], %40 {strides = array<i32>} : memref<1x8x16x16xf32, #tpu.memory_space<vmem>>, vector<1x1x16x16xf32>,
    %c0_14 = arith.constant 0 : index
    %c2 = arith.constant 2 : index
    %c2_15 = arith.constant 2 : index
    %41 = vector.load %arg7[%c0_14, %c2, %c2_15] : memref<4x20x20xf32, #tpu.memory_space<vmem>>, vector<1x16x16xf32>
    %42 = vector.shape_cast %41 : vector<1x16x16xf32> to vector<16x16xf32>
    %43 = vector.shape_cast %37 : vector<16x16xf32> to vector<1x16x16xf32>
    tpu.vector_store %arg7[%c0_14, %c2, %c2_15], %43 {strides = array<i32>} : memref<4x20x20xf32, #tpu.memory_space<vmem>>, vector<1x16x16xf32>,
    %cst_16 = arith.constant 0.000000e+00 : f32
    %44 = vector.broadcast %cst_16 : f32 to vector<16x16xf32>
    %45 = vector.extract_strided_slice %1 {offsets = [0, 0, 0], sizes = [1, 16, 16], strides = [1, 1, 1]} : vector<4x16x16xf32> to vector<1x16x16xf32>
    %46 = vector.shape_cast %45 : vector<1x16x16xf32> to vector<16x16xf32>
    %c1 = arith.constant 1 : index
    %47 = memref.load %arg1[%c1] : memref<16xf32, #tpu.memory_space<smem>>
    %48 = vector.broadcast %47 : f32 to vector<16x16xf32>
    %49 = arith.mulf %46, %48 : vector<16x16xf32>
    %50 = arith.addf %44, %49 : vector<16x16xf32>
    %51 = vector.extract_strided_slice %1 {offsets = [1, 0, 0], sizes = [1, 16, 16], strides = [1, 1, 1]} : vector<4x16x16xf32> to vector<1x16x16xf32>
    %52 = vector.shape_cast %51 : vector<1x16x16xf32> to vector<16x16xf32>
    %c5 = arith.constant 5 : index
    %53 = memref.load %arg1[%c5] : memref<16xf32, #tpu.memory_space<smem>>
    %54 = vector.broadcast %53 : f32 to vector<16x16xf32>
    %55 = arith.mulf %52, %54 : vector<16x16xf32>
    %56 = arith.addf %50, %55 : vector<16x16xf32>
    %57 = vector.extract_strided_slice %1 {offsets = [2, 0, 0], sizes = [1, 16, 16], strides = [1, 1, 1]} : vector<4x16x16xf32> to vector<1x16x16xf32>
    %58 = vector.shape_cast %57 : vector<1x16x16xf32> to vector<16x16xf32>
    %c9 = arith.constant 9 : index
    %59 = memref.load %arg1[%c9] : memref<16xf32, #tpu.memory_space<smem>>
    %60 = vector.broadcast %59 : f32 to vector<16x16xf32>
    %61 = arith.mulf %58, %60 : vector<16x16xf32>
    %62 = arith.addf %56, %61 : vector<16x16xf32>
    %63 = vector.extract_strided_slice %1 {offsets = [3, 0, 0], sizes = [1, 16, 16], strides = [1, 1, 1]} : vector<4x16x16xf32> to vector<1x16x16xf32>
    %64 = vector.shape_cast %63 : vector<1x16x16xf32> to vector<16x16xf32>
    %c13 = arith.constant 13 : index
    %65 = memref.load %arg1[%c13] : memref<16xf32, #tpu.memory_space<smem>>
    %66 = vector.broadcast %65 : f32 to vector<16x16xf32>
    %67 = arith.mulf %64, %66 : vector<16x16xf32>
    %68 = arith.addf %62, %67 : vector<16x16xf32>
    %c1_17 = arith.constant 1 : index
    %69 = memref.load %arg2[%c1_17] : memref<4xf32, #tpu.memory_space<smem>>
    %70 = vector.broadcast %69 : f32 to vector<16x16xf32>
    %71 = arith.addf %68, %70 : vector<16x16xf32>
    %72 = arith.negf %71 : vector<16x16xf32>
    %73 = math.exp %72 : vector<16x16xf32>
    %cst_18 = arith.constant 1.000000e+00 : f32
    %74 = vector.broadcast %cst_18 : f32 to vector<16x16xf32>
    %75 = arith.addf %74, %73 : vector<16x16xf32>
    %76 = arith.divf %74, %75 : vector<16x16xf32>
    %77 = arith.mulf %71, %76 : vector<16x16xf32>
    %c0_19 = arith.constant 0 : index
    %c1_20 = arith.constant 1 : index
    %c0_21 = arith.constant 0 : index
    %c0_22 = arith.constant 0 : index
    %78 = vector.load %arg6[%c0_19, %c1_20, %c0_21, %c0_22] : memref<1x8x16x16xf32, #tpu.memory_space<vmem>>, vector<1x1x16x16xf32>
    %79 = vector.shape_cast %78 : vector<1x1x16x16xf32> to vector<16x16xf32>
    %80 = vector.shape_cast %77 : vector<16x16xf32> to vector<1x1x16x16xf32>
    tpu.vector_store %arg6[%c0_19, %c1_20, %c0_21, %c0_22], %80 {strides = array<i32>} : memref<1x8x16x16xf32, #tpu.memory_space<vmem>>, vector<1x1x16x16xf32>,
    %c1_23 = arith.constant 1 : index
    %c2_24 = arith.constant 2 : index
    %c2_25 = arith.constant 2 : index
    %81 = vector.load %arg7[%c1_23, %c2_24, %c2_25] : memref<4x20x20xf32, #tpu.memory_space<vmem>>, vector<1x16x16xf32>
    %82 = vector.shape_cast %81 : vector<1x16x16xf32> to vector<16x16xf32>
    %83 = vector.shape_cast %77 : vector<16x16xf32> to vector<1x16x16xf32>
    tpu.vector_store %arg7[%c1_23, %c2_24, %c2_25], %83 {strides = array<i32>} : memref<4x20x20xf32, #tpu.memory_space<vmem>>, vector<1x16x16xf32>,
    %cst_26 = arith.constant 0.000000e+00 : f32
    %84 = vector.broadcast %cst_26 : f32 to vector<16x16xf32>
    %85 = vector.extract_strided_slice %1 {offsets = [0, 0, 0], sizes = [1, 16, 16], strides = [1, 1, 1]} : vector<4x16x16xf32> to vector<1x16x16xf32>
    %86 = vector.shape_cast %85 : vector<1x16x16xf32> to vector<16x16xf32>
    %c2_27 = arith.constant 2 : index
    %87 = memref.load %arg1[%c2_27] : memref<16xf32, #tpu.memory_space<smem>>
    %88 = vector.broadcast %87 : f32 to vector<16x16xf32>
    %89 = arith.mulf %86, %88 : vector<16x16xf32>
    %90 = arith.addf %84, %89 : vector<16x16xf32>
    %91 = vector.extract_strided_slice %1 {offsets = [1, 0, 0], sizes = [1, 16, 16], strides = [1, 1, 1]} : vector<4x16x16xf32> to vector<1x16x16xf32>
    %92 = vector.shape_cast %91 : vector<1x16x16xf32> to vector<16x16xf32>
    %c6 = arith.constant 6 : index
    %93 = memref.load %arg1[%c6] : memref<16xf32, #tpu.memory_space<smem>>
    %94 = vector.broadcast %93 : f32 to vector<16x16xf32>
    %95 = arith.mulf %92, %94 : vector<16x16xf32>
    %96 = arith.addf %90, %95 : vector<16x16xf32>
    %97 = vector.extract_strided_slice %1 {offsets = [2, 0, 0], sizes = [1, 16, 16], strides = [1, 1, 1]} : vector<4x16x16xf32> to vector<1x16x16xf32>
    %98 = vector.shape_cast %97 : vector<1x16x16xf32> to vector<16x16xf32>
    %c10 = arith.constant 10 : index
    %99 = memref.load %arg1[%c10] : memref<16xf32, #tpu.memory_space<smem>>
    %100 = vector.broadcast %99 : f32 to vector<16x16xf32>
    %101 = arith.mulf %98, %100 : vector<16x16xf32>
    %102 = arith.addf %96, %101 : vector<16x16xf32>
    %103 = vector.extract_strided_slice %1 {offsets = [3, 0, 0], sizes = [1, 16, 16], strides = [1, 1, 1]} : vector<4x16x16xf32> to vector<1x16x16xf32>
    %104 = vector.shape_cast %103 : vector<1x16x16xf32> to vector<16x16xf32>
    %c14 = arith.constant 14 : index
    %105 = memref.load %arg1[%c14] : memref<16xf32, #tpu.memory_space<smem>>
    %106 = vector.broadcast %105 : f32 to vector<16x16xf32>
    %107 = arith.mulf %104, %106 : vector<16x16xf32>
    %108 = arith.addf %102, %107 : vector<16x16xf32>
    %c2_28 = arith.constant 2 : index
    %109 = memref.load %arg2[%c2_28] : memref<4xf32, #tpu.memory_space<smem>>
    %110 = vector.broadcast %109 : f32 to vector<16x16xf32>
    %111 = arith.addf %108, %110 : vector<16x16xf32>
    %112 = arith.negf %111 : vector<16x16xf32>
    %113 = math.exp %112 : vector<16x16xf32>
    %cst_29 = arith.constant 1.000000e+00 : f32
    %114 = vector.broadcast %cst_29 : f32 to vector<16x16xf32>
    %115 = arith.addf %114, %113 : vector<16x16xf32>
    %116 = arith.divf %114, %115 : vector<16x16xf32>
    %117 = arith.mulf %111, %116 : vector<16x16xf32>
    %c0_30 = arith.constant 0 : index
    %c2_31 = arith.constant 2 : index
    %c0_32 = arith.constant 0 : index
    %c0_33 = arith.constant 0 : index
    %118 = vector.load %arg6[%c0_30, %c2_31, %c0_32, %c0_33] : memref<1x8x16x16xf32, #tpu.memory_space<vmem>>, vector<1x1x16x16xf32>
    %119 = vector.shape_cast %118 : vector<1x1x16x16xf32> to vector<16x16xf32>
    %120 = vector.shape_cast %117 : vector<16x16xf32> to vector<1x1x16x16xf32>
    tpu.vector_store %arg6[%c0_30, %c2_31, %c0_32, %c0_33], %120 {strides = array<i32>} : memref<1x8x16x16xf32, #tpu.memory_space<vmem>>, vector<1x1x16x16xf32>,
    %c2_34 = arith.constant 2 : index
    %c2_35 = arith.constant 2 : index
    %c2_36 = arith.constant 2 : index
    %121 = vector.load %arg7[%c2_34, %c2_35, %c2_36] : memref<4x20x20xf32, #tpu.memory_space<vmem>>, vector<1x16x16xf32>
    %122 = vector.shape_cast %121 : vector<1x16x16xf32> to vector<16x16xf32>
    %123 = vector.shape_cast %117 : vector<16x16xf32> to vector<1x16x16xf32>
    tpu.vector_store %arg7[%c2_34, %c2_35, %c2_36], %123 {strides = array<i32>} : memref<4x20x20xf32, #tpu.memory_space<vmem>>, vector<1x16x16xf32>,
    %cst_37 = arith.constant 0.000000e+00 : f32
    %124 = vector.broadcast %cst_37 : f32 to vector<16x16xf32>
    %125 = vector.extract_strided_slice %1 {offsets = [0, 0, 0], sizes = [1, 16, 16], strides = [1, 1, 1]} : vector<4x16x16xf32> to vector<1x16x16xf32>
    %126 = vector.shape_cast %125 : vector<1x16x16xf32> to vector<16x16xf32>
    %c3 = arith.constant 3 : index
    %127 = memref.load %arg1[%c3] : memref<16xf32, #tpu.memory_space<smem>>
    %128 = vector.broadcast %127 : f32 to vector<16x16xf32>
    %129 = arith.mulf %126, %128 : vector<16x16xf32>
    %130 = arith.addf %124, %129 : vector<16x16xf32>
    %131 = vector.extract_strided_slice %1 {offsets = [1, 0, 0], sizes = [1, 16, 16], strides = [1, 1, 1]} : vector<4x16x16xf32> to vector<1x16x16xf32>
    %132 = vector.shape_cast %131 : vector<1x16x16xf32> to vector<16x16xf32>
    %c7 = arith.constant 7 : index
    %133 = memref.load %arg1[%c7] : memref<16xf32, #tpu.memory_space<smem>>
    %134 = vector.broadcast %133 : f32 to vector<16x16xf32>
    %135 = arith.mulf %132, %134 : vector<16x16xf32>
    %136 = arith.addf %130, %135 : vector<16x16xf32>
    %137 = vector.extract_strided_slice %1 {offsets = [2, 0, 0], sizes = [1, 16, 16], strides = [1, 1, 1]} : vector<4x16x16xf32> to vector<1x16x16xf32>
    %138 = vector.shape_cast %137 : vector<1x16x16xf32> to vector<16x16xf32>
    %c11 = arith.constant 11 : index
    %139 = memref.load %arg1[%c11] : memref<16xf32, #tpu.memory_space<smem>>
    %140 = vector.broadcast %139 : f32 to vector<16x16xf32>
    %141 = arith.mulf %138, %140 : vector<16x16xf32>
    %142 = arith.addf %136, %141 : vector<16x16xf32>
    %143 = vector.extract_strided_slice %1 {offsets = [3, 0, 0], sizes = [1, 16, 16], strides = [1, 1, 1]} : vector<4x16x16xf32> to vector<1x16x16xf32>
    %144 = vector.shape_cast %143 : vector<1x16x16xf32> to vector<16x16xf32>
    %c15 = arith.constant 15 : index
    %145 = memref.load %arg1[%c15] : memref<16xf32, #tpu.memory_space<smem>>
    %146 = vector.broadcast %145 : f32 to vector<16x16xf32>
    %147 = arith.mulf %144, %146 : vector<16x16xf32>
    %148 = arith.addf %142, %147 : vector<16x16xf32>
    %c3_38 = arith.constant 3 : index
    %149 = memref.load %arg2[%c3_38] : memref<4xf32, #tpu.memory_space<smem>>
    %150 = vector.broadcast %149 : f32 to vector<16x16xf32>
    %151 = arith.addf %148, %150 : vector<16x16xf32>
    %152 = arith.negf %151 : vector<16x16xf32>
    %153 = math.exp %152 : vector<16x16xf32>
    %cst_39 = arith.constant 1.000000e+00 : f32
    %154 = vector.broadcast %cst_39 : f32 to vector<16x16xf32>
    %155 = arith.addf %154, %153 : vector<16x16xf32>
    %156 = arith.divf %154, %155 : vector<16x16xf32>
    %157 = arith.mulf %151, %156 : vector<16x16xf32>
    %c0_40 = arith.constant 0 : index
    %c3_41 = arith.constant 3 : index
    %c0_42 = arith.constant 0 : index
    %c0_43 = arith.constant 0 : index
    %158 = vector.load %arg6[%c0_40, %c3_41, %c0_42, %c0_43] : memref<1x8x16x16xf32, #tpu.memory_space<vmem>>, vector<1x1x16x16xf32>
    %159 = vector.shape_cast %158 : vector<1x1x16x16xf32> to vector<16x16xf32>
    %160 = vector.shape_cast %157 : vector<16x16xf32> to vector<1x1x16x16xf32>
    tpu.vector_store %arg6[%c0_40, %c3_41, %c0_42, %c0_43], %160 {strides = array<i32>} : memref<1x8x16x16xf32, #tpu.memory_space<vmem>>, vector<1x1x16x16xf32>,
    %c3_44 = arith.constant 3 : index
    %c2_45 = arith.constant 2 : index
    %c2_46 = arith.constant 2 : index
    %161 = vector.load %arg7[%c3_44, %c2_45, %c2_46] : memref<4x20x20xf32, #tpu.memory_space<vmem>>, vector<1x16x16xf32>
    %162 = vector.shape_cast %161 : vector<1x16x16xf32> to vector<16x16xf32>
    %163 = vector.shape_cast %157 : vector<16x16xf32> to vector<1x16x16xf32>
    tpu.vector_store %arg7[%c3_44, %c2_45, %c2_46], %163 {strides = array<i32>} : memref<4x20x20xf32, #tpu.memory_space<vmem>>, vector<1x16x16xf32>,
    %cst_47 = arith.constant 0.000000e+00 : f32
    %164 = vector.broadcast %cst_47 : f32 to vector<16x16xf32>
    %c0_48 = arith.constant 0 : index
    %c0_49 = arith.constant 0 : index
    %c0_50 = arith.constant 0 : index
    %165 = vector.load %arg7[%c0_48, %c0_49, %c0_50] : memref<4x20x20xf32, #tpu.memory_space<vmem>>, vector<1x16x16xf32>
    %166 = vector.shape_cast %165 : vector<1x16x16xf32> to vector<16x16xf32>
    %c0_51 = arith.constant 0 : index
    %167 = memref.load %arg3[%c0_51] : memref<100xf32, #tpu.memory_space<smem>>
    %168 = vector.broadcast %167 : f32 to vector<16x16xf32>
    %169 = arith.mulf %166, %168 : vector<16x16xf32>
    %170 = arith.addf %164, %169 : vector<16x16xf32>
    %c0_52 = arith.constant 0 : index
    %c0_53 = arith.constant 0 : index
    %c1_54 = arith.constant 1 : index
    %171 = vector.load %arg7[%c0_52, %c0_53, %c1_54] : memref<4x20x20xf32, #tpu.memory_space<vmem>>, vector<1x16x16xf32>
    %172 = vector.shape_cast %171 : vector<1x16x16xf32> to vector<16x16xf32>
    %c1_55 = arith.constant 1 : index
    %173 = memref.load %arg3[%c1_55] : memref<100xf32, #tpu.memory_space<smem>>
    %174 = vector.broadcast %173 : f32 to vector<16x16xf32>
    %175 = arith.mulf %172, %174 : vector<16x16xf32>
    %176 = arith.addf %170, %175 : vector<16x16xf32>
    %c0_56 = arith.constant 0 : index
    %c0_57 = arith.constant 0 : index
    %c2_58 = arith.constant 2 : index
    %177 = vector.load %arg7[%c0_56, %c0_57, %c2_58] : memref<4x20x20xf32, #tpu.memory_space<vmem>>, vector<1x16x16xf32>
    %178 = vector.shape_cast %177 : vector<1x16x16xf32> to vector<16x16xf32>
    %c2_59 = arith.constant 2 : index
    %179 = memref.load %arg3[%c2_59] : memref<100xf32, #tpu.memory_space<smem>>
    %180 = vector.broadcast %179 : f32 to vector<16x16xf32>
    %181 = arith.mulf %178, %180 : vector<16x16xf32>
    %182 = arith.addf %176, %181 : vector<16x16xf32>
    %c0_60 = arith.constant 0 : index
    %c0_61 = arith.constant 0 : index
    %c3_62 = arith.constant 3 : index
    %183 = vector.load %arg7[%c0_60, %c0_61, %c3_62] : memref<4x20x20xf32, #tpu.memory_space<vmem>>, vector<1x16x16xf32>
    %184 = vector.shape_cast %183 : vector<1x16x16xf32> to vector<16x16xf32>
    %c3_63 = arith.constant 3 : index
    %185 = memref.load %arg3[%c3_63] : memref<100xf32, #tpu.memory_space<smem>>
    %186 = vector.broadcast %185 : f32 to vector<16x16xf32>
    %187 = arith.mulf %184, %186 : vector<16x16xf32>
    %188 = arith.addf %182, %187 : vector<16x16xf32>
    %c0_64 = arith.constant 0 : index
    %c0_65 = arith.constant 0 : index
    %c4_66 = arith.constant 4 : index
    %189 = vector.load %arg7[%c0_64, %c0_65, %c4_66] : memref<4x20x20xf32, #tpu.memory_space<vmem>>, vector<1x16x16xf32>
    %190 = vector.shape_cast %189 : vector<1x16x16xf32> to vector<16x16xf32>
    %c4_67 = arith.constant 4 : index
    %191 = memref.load %arg3[%c4_67] : memref<100xf32, #tpu.memory_space<smem>>
    %192 = vector.broadcast %191 : f32 to vector<16x16xf32>
    %193 = arith.mulf %190, %192 : vector<16x16xf32>
    %194 = arith.addf %188, %193 : vector<16x16xf32>
    %c0_68 = arith.constant 0 : index
    %c1_69 = arith.constant 1 : index
    %c0_70 = arith.constant 0 : index
    %195 = vector.load %arg7[%c0_68, %c1_69, %c0_70] : memref<4x20x20xf32, #tpu.memory_space<vmem>>, vector<1x16x16xf32>
    %196 = vector.shape_cast %195 : vector<1x16x16xf32> to vector<16x16xf32>
    %c5_71 = arith.constant 5 : index
    %197 = memref.load %arg3[%c5_71] : memref<100xf32, #tpu.memory_space<smem>>
    %198 = vector.broadcast %197 : f32 to vector<16x16xf32>
    %199 = arith.mulf %196, %198 : vector<16x16xf32>
    %200 = arith.addf %194, %199 : vector<16x16xf32>
    %c0_72 = arith.constant 0 : index
    %c1_73 = arith.constant 1 : index
    %c1_74 = arith.constant 1 : index
    %201 = vector.load %arg7[%c0_72, %c1_73, %c1_74] : memref<4x20x20xf32, #tpu.memory_space<vmem>>, vector<1x16x16xf32>
    %202 = vector.shape_cast %201 : vector<1x16x16xf32> to vector<16x16xf32>
    %c6_75 = arith.constant 6 : index
    %203 = memref.load %arg3[%c6_75] : memref<100xf32, #tpu.memory_space<smem>>
    %204 = vector.broadcast %203 : f32 to vector<16x16xf32>
    %205 = arith.mulf %202, %204 : vector<16x16xf32>
    %206 = arith.addf %200, %205 : vector<16x16xf32>
    %c0_76 = arith.constant 0 : index
    %c1_77 = arith.constant 1 : index
    %c2_78 = arith.constant 2 : index
    %207 = vector.load %arg7[%c0_76, %c1_77, %c2_78] : memref<4x20x20xf32, #tpu.memory_space<vmem>>, vector<1x16x16xf32>
    %208 = vector.shape_cast %207 : vector<1x16x16xf32> to vector<16x16xf32>
    %c7_79 = arith.constant 7 : index
    %209 = memref.load %arg3[%c7_79] : memref<100xf32, #tpu.memory_space<smem>>
    %210 = vector.broadcast %209 : f32 to vector<16x16xf32>
    %211 = arith.mulf %208, %210 : vector<16x16xf32>
    %212 = arith.addf %206, %211 : vector<16x16xf32>
    %c0_80 = arith.constant 0 : index
    %c1_81 = arith.constant 1 : index
    %c3_82 = arith.constant 3 : index
    %213 = vector.load %arg7[%c0_80, %c1_81, %c3_82] : memref<4x20x20xf32, #tpu.memory_space<vmem>>, vector<1x16x16xf32>
    %214 = vector.shape_cast %213 : vector<1x16x16xf32> to vector<16x16xf32>
    %c8_83 = arith.constant 8 : index
    %215 = memref.load %arg3[%c8_83] : memref<100xf32, #tpu.memory_space<smem>>
    %216 = vector.broadcast %215 : f32 to vector<16x16xf32>
    %217 = arith.mulf %214, %216 : vector<16x16xf32>
    %218 = arith.addf %212, %217 : vector<16x16xf32>
    %c0_84 = arith.constant 0 : index
    %c1_85 = arith.constant 1 : index
    %c4_86 = arith.constant 4 : index
    %219 = vector.load %arg7[%c0_84, %c1_85, %c4_86] : memref<4x20x20xf32, #tpu.memory_space<vmem>>, vector<1x16x16xf32>
    %220 = vector.shape_cast %219 : vector<1x16x16xf32> to vector<16x16xf32>
    %c9_87 = arith.constant 9 : index
    %221 = memref.load %arg3[%c9_87] : memref<100xf32, #tpu.memory_space<smem>>
    %222 = vector.broadcast %221 : f32 to vector<16x16xf32>
    %223 = arith.mulf %220, %222 : vector<16x16xf32>
    %224 = arith.addf %218, %223 : vector<16x16xf32>
    %c0_88 = arith.constant 0 : index
    %c2_89 = arith.constant 2 : index
    %c0_90 = arith.constant 0 : index
    %225 = vector.load %arg7[%c0_88, %c2_89, %c0_90] : memref<4x20x20xf32, #tpu.memory_space<vmem>>, vector<1x16x16xf32>
    %226 = vector.shape_cast %225 : vector<1x16x16xf32> to vector<16x16xf32>
    %c10_91 = arith.constant 10 : index
    %227 = memref.load %arg3[%c10_91] : memref<100xf32, #tpu.memory_space<smem>>
    %228 = vector.broadcast %227 : f32 to vector<16x16xf32>
    %229 = arith.mulf %226, %228 : vector<16x16xf32>
    %230 = arith.addf %224, %229 : vector<16x16xf32>
    %c0_92 = arith.constant 0 : index
    %c2_93 = arith.constant 2 : index
    %c1_94 = arith.constant 1 : index
    %231 = vector.load %arg7[%c0_92, %c2_93, %c1_94] : memref<4x20x20xf32, #tpu.memory_space<vmem>>, vector<1x16x16xf32>
    %232 = vector.shape_cast %231 : vector<1x16x16xf32> to vector<16x16xf32>
    %c11_95 = arith.constant 11 : index
    %233 = memref.load %arg3[%c11_95] : memref<100xf32, #tpu.memory_space<smem>>
    %234 = vector.broadcast %233 : f32 to vector<16x16xf32>
    %235 = arith.mulf %232, %234 : vector<16x16xf32>
    %236 = arith.addf %230, %235 : vector<16x16xf32>
    %c0_96 = arith.constant 0 : index
    %c2_97 = arith.constant 2 : index
    %c2_98 = arith.constant 2 : index
    %237 = vector.load %arg7[%c0_96, %c2_97, %c2_98] : memref<4x20x20xf32, #tpu.memory_space<vmem>>, vector<1x16x16xf32>
    %238 = vector.shape_cast %237 : vector<1x16x16xf32> to vector<16x16xf32>
    %c12_99 = arith.constant 12 : index
    %239 = memref.load %arg3[%c12_99] : memref<100xf32, #tpu.memory_space<smem>>
    %240 = vector.broadcast %239 : f32 to vector<16x16xf32>
    %241 = arith.mulf %238, %240 : vector<16x16xf32>
    %242 = arith.addf %236, %241 : vector<16x16xf32>
    %c0_100 = arith.constant 0 : index
    %c2_101 = arith.constant 2 : index
    %c3_102 = arith.constant 3 : index
    %243 = vector.load %arg7[%c0_100, %c2_101, %c3_102] : memref<4x20x20xf32, #tpu.memory_space<vmem>>, vector<1x16x16xf32>
    %244 = vector.shape_cast %243 : vector<1x16x16xf32> to vector<16x16xf32>
    %c13_103 = arith.constant 13 : index
    %245 = memref.load %arg3[%c13_103] : memref<100xf32, #tpu.memory_space<smem>>
    %246 = vector.broadcast %245 : f32 to vector<16x16xf32>
    %247 = arith.mulf %244, %246 : vector<16x16xf32>
    %248 = arith.addf %242, %247 : vector<16x16xf32>
    %c0_104 = arith.constant 0 : index
    %c2_105 = arith.constant 2 : index
    %c4_106 = arith.constant 4 : index
    %249 = vector.load %arg7[%c0_104, %c2_105, %c4_106] : memref<4x20x20xf32, #tpu.memory_space<vmem>>, vector<1x16x16xf32>
    %250 = vector.shape_cast %249 : vector<1x16x16xf32> to vector<16x16xf32>
    %c14_107 = arith.constant 14 : index
    %251 = memref.load %arg3[%c14_107] : memref<100xf32, #tpu.memory_space<smem>>
    %252 = vector.broadcast %251 : f32 to vector<16x16xf32>
    %253 = arith.mulf %250, %252 : vector<16x16xf32>
    %254 = arith.addf %248, %253 : vector<16x16xf32>
    %c0_108 = arith.constant 0 : index
    %c3_109 = arith.constant 3 : index
    %c0_110 = arith.constant 0 : index
    %255 = vector.load %arg7[%c0_108, %c3_109, %c0_110] : memref<4x20x20xf32, #tpu.memory_space<vmem>>, vector<1x16x16xf32>
    %256 = vector.shape_cast %255 : vector<1x16x16xf32> to vector<16x16xf32>
    %c15_111 = arith.constant 15 : index
    %257 = memref.load %arg3[%c15_111] : memref<100xf32, #tpu.memory_space<smem>>
    %258 = vector.broadcast %257 : f32 to vector<16x16xf32>
    %259 = arith.mulf %256, %258 : vector<16x16xf32>
    %260 = arith.addf %254, %259 : vector<16x16xf32>
    %c0_112 = arith.constant 0 : index
    %c3_113 = arith.constant 3 : index
    %c1_114 = arith.constant 1 : index
    %261 = vector.load %arg7[%c0_112, %c3_113, %c1_114] : memref<4x20x20xf32, #tpu.memory_space<vmem>>, vector<1x16x16xf32>
    %262 = vector.shape_cast %261 : vector<1x16x16xf32> to vector<16x16xf32>
    %c16 = arith.constant 16 : index
    %263 = memref.load %arg3[%c16] : memref<100xf32, #tpu.memory_space<smem>>
    %264 = vector.broadcast %263 : f32 to vector<16x16xf32>
    %265 = arith.mulf %262, %264 : vector<16x16xf32>
    %266 = arith.addf %260, %265 : vector<16x16xf32>
    %c0_115 = arith.constant 0 : index
    %c3_116 = arith.constant 3 : index
    %c2_117 = arith.constant 2 : index
    %267 = vector.load %arg7[%c0_115, %c3_116, %c2_117] : memref<4x20x20xf32, #tpu.memory_space<vmem>>, vector<1x16x16xf32>
    %268 = vector.shape_cast %267 : vector<1x16x16xf32> to vector<16x16xf32>
    %c17 = arith.constant 17 : index
    %269 = memref.load %arg3[%c17] : memref<100xf32, #tpu.memory_space<smem>>
    %270 = vector.broadcast %269 : f32 to vector<16x16xf32>
    %271 = arith.mulf %268, %270 : vector<16x16xf32>
    %272 = arith.addf %266, %271 : vector<16x16xf32>
    %c0_118 = arith.constant 0 : index
    %c3_119 = arith.constant 3 : index
    %c3_120 = arith.constant 3 : index
    %273 = vector.load %arg7[%c0_118, %c3_119, %c3_120] : memref<4x20x20xf32, #tpu.memory_space<vmem>>, vector<1x16x16xf32>
    %274 = vector.shape_cast %273 : vector<1x16x16xf32> to vector<16x16xf32>
    %c18 = arith.constant 18 : index
    %275 = memref.load %arg3[%c18] : memref<100xf32, #tpu.memory_space<smem>>
    %276 = vector.broadcast %275 : f32 to vector<16x16xf32>
    %277 = arith.mulf %274, %276 : vector<16x16xf32>
    %278 = arith.addf %272, %277 : vector<16x16xf32>
    %c0_121 = arith.constant 0 : index
    %c3_122 = arith.constant 3 : index
    %c4_123 = arith.constant 4 : index
    %279 = vector.load %arg7[%c0_121, %c3_122, %c4_123] : memref<4x20x20xf32, #tpu.memory_space<vmem>>, vector<1x16x16xf32>
    %280 = vector.shape_cast %279 : vector<1x16x16xf32> to vector<16x16xf32>
    %c19 = arith.constant 19 : index
    %281 = memref.load %arg3[%c19] : memref<100xf32, #tpu.memory_space<smem>>
    %282 = vector.broadcast %281 : f32 to vector<16x16xf32>
    %283 = arith.mulf %280, %282 : vector<16x16xf32>
    %284 = arith.addf %278, %283 : vector<16x16xf32>
    %c0_124 = arith.constant 0 : index
    %c4_125 = arith.constant 4 : index
    %c0_126 = arith.constant 0 : index
    %285 = vector.load %arg7[%c0_124, %c4_125, %c0_126] : memref<4x20x20xf32, #tpu.memory_space<vmem>>, vector<1x16x16xf32>
    %286 = vector.shape_cast %285 : vector<1x16x16xf32> to vector<16x16xf32>
    %c20 = arith.constant 20 : index
    %287 = memref.load %arg3[%c20] : memref<100xf32, #tpu.memory_space<smem>>
    %288 = vector.broadcast %287 : f32 to vector<16x16xf32>
    %289 = arith.mulf %286, %288 : vector<16x16xf32>
    %290 = arith.addf %284, %289 : vector<16x16xf32>
    %c0_127 = arith.constant 0 : index
    %c4_128 = arith.constant 4 : index
    %c1_129 = arith.constant 1 : index
    %291 = vector.load %arg7[%c0_127, %c4_128, %c1_129] : memref<4x20x20xf32, #tpu.memory_space<vmem>>, vector<1x16x16xf32>
    %292 = vector.shape_cast %291 : vector<1x16x16xf32> to vector<16x16xf32>
    %c21 = arith.constant 21 : index
    %293 = memref.load %arg3[%c21] : memref<100xf32, #tpu.memory_space<smem>>
    %294 = vector.broadcast %293 : f32 to vector<16x16xf32>
    %295 = arith.mulf %292, %294 : vector<16x16xf32>
    %296 = arith.addf %290, %295 : vector<16x16xf32>
    %c0_130 = arith.constant 0 : index
    %c4_131 = arith.constant 4 : index
    %c2_132 = arith.constant 2 : index
    %297 = vector.load %arg7[%c0_130, %c4_131, %c2_132] : memref<4x20x20xf32, #tpu.memory_space<vmem>>, vector<1x16x16xf32>
    %298 = vector.shape_cast %297 : vector<1x16x16xf32> to vector<16x16xf32>
    %c22 = arith.constant 22 : index
    %299 = memref.load %arg3[%c22] : memref<100xf32, #tpu.memory_space<smem>>
    %300 = vector.broadcast %299 : f32 to vector<16x16xf32>
    %301 = arith.mulf %298, %300 : vector<16x16xf32>
    %302 = arith.addf %296, %301 : vector<16x16xf32>
    %c0_133 = arith.constant 0 : index
    %c4_134 = arith.constant 4 : index
    %c3_135 = arith.constant 3 : index
    %303 = vector.load %arg7[%c0_133, %c4_134, %c3_135] : memref<4x20x20xf32, #tpu.memory_space<vmem>>, vector<1x16x16xf32>
    %304 = vector.shape_cast %303 : vector<1x16x16xf32> to vector<16x16xf32>
    %c23 = arith.constant 23 : index
    %305 = memref.load %arg3[%c23] : memref<100xf32, #tpu.memory_space<smem>>
    %306 = vector.broadcast %305 : f32 to vector<16x16xf32>
    %307 = arith.mulf %304, %306 : vector<16x16xf32>
    %308 = arith.addf %302, %307 : vector<16x16xf32>
    %c0_136 = arith.constant 0 : index
    %c4_137 = arith.constant 4 : index
    %c4_138 = arith.constant 4 : index
    %309 = vector.load %arg7[%c0_136, %c4_137, %c4_138] : memref<4x20x20xf32, #tpu.memory_space<vmem>>, vector<1x16x16xf32>
    %310 = vector.shape_cast %309 : vector<1x16x16xf32> to vector<16x16xf32>
    %c24 = arith.constant 24 : index
    %311 = memref.load %arg3[%c24] : memref<100xf32, #tpu.memory_space<smem>>
    %312 = vector.broadcast %311 : f32 to vector<16x16xf32>
    %313 = arith.mulf %310, %312 : vector<16x16xf32>
    %314 = arith.addf %308, %313 : vector<16x16xf32>
    %c0_139 = arith.constant 0 : index
    %315 = memref.load %arg4[%c0_139] : memref<4xf32, #tpu.memory_space<smem>>
    %316 = vector.broadcast %315 : f32 to vector<16x16xf32>
    %317 = arith.addf %314, %316 : vector<16x16xf32>
    %318 = arith.negf %317 : vector<16x16xf32>
    %319 = math.exp %318 : vector<16x16xf32>
    %cst_140 = arith.constant 1.000000e+00 : f32
    %320 = vector.broadcast %cst_140 : f32 to vector<16x16xf32>
    %321 = arith.addf %320, %319 : vector<16x16xf32>
    %322 = arith.divf %320, %321 : vector<16x16xf32>
    %323 = arith.mulf %317, %322 : vector<16x16xf32>
    %c0_141 = arith.constant 0 : index
    %c4_142 = arith.constant 4 : index
    %c0_143 = arith.constant 0 : index
    %c0_144 = arith.constant 0 : index
    %324 = vector.load %arg6[%c0_141, %c4_142, %c0_143, %c0_144] : memref<1x8x16x16xf32, #tpu.memory_space<vmem>>, vector<1x1x16x16xf32>
    %325 = vector.shape_cast %324 : vector<1x1x16x16xf32> to vector<16x16xf32>
    %326 = vector.shape_cast %323 : vector<16x16xf32> to vector<1x1x16x16xf32>
    tpu.vector_store %arg6[%c0_141, %c4_142, %c0_143, %c0_144], %326 {strides = array<i32>} : memref<1x8x16x16xf32, #tpu.memory_space<vmem>>, vector<1x1x16x16xf32>,
    %cst_145 = arith.constant 0.000000e+00 : f32
    %327 = vector.broadcast %cst_145 : f32 to vector<16x16xf32>
    %c1_146 = arith.constant 1 : index
    %c0_147 = arith.constant 0 : index
    %c0_148 = arith.constant 0 : index
    %328 = vector.load %arg7[%c1_146, %c0_147, %c0_148] : memref<4x20x20xf32, #tpu.memory_space<vmem>>, vector<1x16x16xf32>
    %329 = vector.shape_cast %328 : vector<1x16x16xf32> to vector<16x16xf32>
    %c25 = arith.constant 25 : index
    %330 = memref.load %arg3[%c25] : memref<100xf32, #tpu.memory_space<smem>>
    %331 = vector.broadcast %330 : f32 to vector<16x16xf32>
    %332 = arith.mulf %329, %331 : vector<16x16xf32>
    %333 = arith.addf %327, %332 : vector<16x16xf32>
    %c1_149 = arith.constant 1 : index
    %c0_150 = arith.constant 0 : index
    %c1_151 = arith.constant 1 : index
    %334 = vector.load %arg7[%c1_149, %c0_150, %c1_151] : memref<4x20x20xf32, #tpu.memory_space<vmem>>, vector<1x16x16xf32>
    %335 = vector.shape_cast %334 : vector<1x16x16xf32> to vector<16x16xf32>
    %c26 = arith.constant 26 : index
    %336 = memref.load %arg3[%c26] : memref<100xf32, #tpu.memory_space<smem>>
    %337 = vector.broadcast %336 : f32 to vector<16x16xf32>
    %338 = arith.mulf %335, %337 : vector<16x16xf32>
    %339 = arith.addf %333, %338 : vector<16x16xf32>
    %c1_152 = arith.constant 1 : index
    %c0_153 = arith.constant 0 : index
    %c2_154 = arith.constant 2 : index
    %340 = vector.load %arg7[%c1_152, %c0_153, %c2_154] : memref<4x20x20xf32, #tpu.memory_space<vmem>>, vector<1x16x16xf32>
    %341 = vector.shape_cast %340 : vector<1x16x16xf32> to vector<16x16xf32>
    %c27 = arith.constant 27 : index
    %342 = memref.load %arg3[%c27] : memref<100xf32, #tpu.memory_space<smem>>
    %343 = vector.broadcast %342 : f32 to vector<16x16xf32>
    %344 = arith.mulf %341, %343 : vector<16x16xf32>
    %345 = arith.addf %339, %344 : vector<16x16xf32>
    %c1_155 = arith.constant 1 : index
    %c0_156 = arith.constant 0 : index
    %c3_157 = arith.constant 3 : index
    %346 = vector.load %arg7[%c1_155, %c0_156, %c3_157] : memref<4x20x20xf32, #tpu.memory_space<vmem>>, vector<1x16x16xf32>
    %347 = vector.shape_cast %346 : vector<1x16x16xf32> to vector<16x16xf32>
    %c28 = arith.constant 28 : index
    %348 = memref.load %arg3[%c28] : memref<100xf32, #tpu.memory_space<smem>>
    %349 = vector.broadcast %348 : f32 to vector<16x16xf32>
    %350 = arith.mulf %347, %349 : vector<16x16xf32>
    %351 = arith.addf %345, %350 : vector<16x16xf32>
    %c1_158 = arith.constant 1 : index
    %c0_159 = arith.constant 0 : index
    %c4_160 = arith.constant 4 : index
    %352 = vector.load %arg7[%c1_158, %c0_159, %c4_160] : memref<4x20x20xf32, #tpu.memory_space<vmem>>, vector<1x16x16xf32>
    %353 = vector.shape_cast %352 : vector<1x16x16xf32> to vector<16x16xf32>
    %c29 = arith.constant 29 : index
    %354 = memref.load %arg3[%c29] : memref<100xf32, #tpu.memory_space<smem>>
    %355 = vector.broadcast %354 : f32 to vector<16x16xf32>
    %356 = arith.mulf %353, %355 : vector<16x16xf32>
    %357 = arith.addf %351, %356 : vector<16x16xf32>
    %c1_161 = arith.constant 1 : index
    %c1_162 = arith.constant 1 : index
    %c0_163 = arith.constant 0 : index
    %358 = vector.load %arg7[%c1_161, %c1_162, %c0_163] : memref<4x20x20xf32, #tpu.memory_space<vmem>>, vector<1x16x16xf32>
    %359 = vector.shape_cast %358 : vector<1x16x16xf32> to vector<16x16xf32>
    %c30 = arith.constant 30 : index
    %360 = memref.load %arg3[%c30] : memref<100xf32, #tpu.memory_space<smem>>
    %361 = vector.broadcast %360 : f32 to vector<16x16xf32>
    %362 = arith.mulf %359, %361 : vector<16x16xf32>
    %363 = arith.addf %357, %362 : vector<16x16xf32>
    %c1_164 = arith.constant 1 : index
    %c1_165 = arith.constant 1 : index
    %c1_166 = arith.constant 1 : index
    %364 = vector.load %arg7[%c1_164, %c1_165, %c1_166] : memref<4x20x20xf32, #tpu.memory_space<vmem>>, vector<1x16x16xf32>
    %365 = vector.shape_cast %364 : vector<1x16x16xf32> to vector<16x16xf32>
    %c31 = arith.constant 31 : index
    %366 = memref.load %arg3[%c31] : memref<100xf32, #tpu.memory_space<smem>>
    %367 = vector.broadcast %366 : f32 to vector<16x16xf32>
    %368 = arith.mulf %365, %367 : vector<16x16xf32>
    %369 = arith.addf %363, %368 : vector<16x16xf32>
    %c1_167 = arith.constant 1 : index
    %c1_168 = arith.constant 1 : index
    %c2_169 = arith.constant 2 : index
    %370 = vector.load %arg7[%c1_167, %c1_168, %c2_169] : memref<4x20x20xf32, #tpu.memory_space<vmem>>, vector<1x16x16xf32>
    %371 = vector.shape_cast %370 : vector<1x16x16xf32> to vector<16x16xf32>
    %c32 = arith.constant 32 : index
    %372 = memref.load %arg3[%c32] : memref<100xf32, #tpu.memory_space<smem>>
    %373 = vector.broadcast %372 : f32 to vector<16x16xf32>
    %374 = arith.mulf %371, %373 : vector<16x16xf32>
    %375 = arith.addf %369, %374 : vector<16x16xf32>
    %c1_170 = arith.constant 1 : index
    %c1_171 = arith.constant 1 : index
    %c3_172 = arith.constant 3 : index
    %376 = vector.load %arg7[%c1_170, %c1_171, %c3_172] : memref<4x20x20xf32, #tpu.memory_space<vmem>>, vector<1x16x16xf32>
    %377 = vector.shape_cast %376 : vector<1x16x16xf32> to vector<16x16xf32>
    %c33 = arith.constant 33 : index
    %378 = memref.load %arg3[%c33] : memref<100xf32, #tpu.memory_space<smem>>
    %379 = vector.broadcast %378 : f32 to vector<16x16xf32>
    %380 = arith.mulf %377, %379 : vector<16x16xf32>
    %381 = arith.addf %375, %380 : vector<16x16xf32>
    %c1_173 = arith.constant 1 : index
    %c1_174 = arith.constant 1 : index
    %c4_175 = arith.constant 4 : index
    %382 = vector.load %arg7[%c1_173, %c1_174, %c4_175] : memref<4x20x20xf32, #tpu.memory_space<vmem>>, vector<1x16x16xf32>
    %383 = vector.shape_cast %382 : vector<1x16x16xf32> to vector<16x16xf32>
    %c34 = arith.constant 34 : index
    %384 = memref.load %arg3[%c34] : memref<100xf32, #tpu.memory_space<smem>>
    %385 = vector.broadcast %384 : f32 to vector<16x16xf32>
    %386 = arith.mulf %383, %385 : vector<16x16xf32>
    %387 = arith.addf %381, %386 : vector<16x16xf32>
    %c1_176 = arith.constant 1 : index
    %c2_177 = arith.constant 2 : index
    %c0_178 = arith.constant 0 : index
    %388 = vector.load %arg7[%c1_176, %c2_177, %c0_178] : memref<4x20x20xf32, #tpu.memory_space<vmem>>, vector<1x16x16xf32>
    %389 = vector.shape_cast %388 : vector<1x16x16xf32> to vector<16x16xf32>
    %c35 = arith.constant 35 : index
    %390 = memref.load %arg3[%c35] : memref<100xf32, #tpu.memory_space<smem>>
    %391 = vector.broadcast %390 : f32 to vector<16x16xf32>
    %392 = arith.mulf %389, %391 : vector<16x16xf32>
    %393 = arith.addf %387, %392 : vector<16x16xf32>
    %c1_179 = arith.constant 1 : index
    %c2_180 = arith.constant 2 : index
    %c1_181 = arith.constant 1 : index
    %394 = vector.load %arg7[%c1_179, %c2_180, %c1_181] : memref<4x20x20xf32, #tpu.memory_space<vmem>>, vector<1x16x16xf32>
    %395 = vector.shape_cast %394 : vector<1x16x16xf32> to vector<16x16xf32>
    %c36 = arith.constant 36 : index
    %396 = memref.load %arg3[%c36] : memref<100xf32, #tpu.memory_space<smem>>
    %397 = vector.broadcast %396 : f32 to vector<16x16xf32>
    %398 = arith.mulf %395, %397 : vector<16x16xf32>
    %399 = arith.addf %393, %398 : vector<16x16xf32>
    %c1_182 = arith.constant 1 : index
    %c2_183 = arith.constant 2 : index
    %c2_184 = arith.constant 2 : index
    %400 = vector.load %arg7[%c1_182, %c2_183, %c2_184] : memref<4x20x20xf32, #tpu.memory_space<vmem>>, vector<1x16x16xf32>
    %401 = vector.shape_cast %400 : vector<1x16x16xf32> to vector<16x16xf32>
    %c37 = arith.constant 37 : index
    %402 = memref.load %arg3[%c37] : memref<100xf32, #tpu.memory_space<smem>>
    %403 = vector.broadcast %402 : f32 to vector<16x16xf32>
    %404 = arith.mulf %401, %403 : vector<16x16xf32>
    %405 = arith.addf %399, %404 : vector<16x16xf32>
    %c1_185 = arith.constant 1 : index
    %c2_186 = arith.constant 2 : index
    %c3_187 = arith.constant 3 : index
    %406 = vector.load %arg7[%c1_185, %c2_186, %c3_187] : memref<4x20x20xf32, #tpu.memory_space<vmem>>, vector<1x16x16xf32>
    %407 = vector.shape_cast %406 : vector<1x16x16xf32> to vector<16x16xf32>
    %c38 = arith.constant 38 : index
    %408 = memref.load %arg3[%c38] : memref<100xf32, #tpu.memory_space<smem>>
    %409 = vector.broadcast %408 : f32 to vector<16x16xf32>
    %410 = arith.mulf %407, %409 : vector<16x16xf32>
    %411 = arith.addf %405, %410 : vector<16x16xf32>
    %c1_188 = arith.constant 1 : index
    %c2_189 = arith.constant 2 : index
    %c4_190 = arith.constant 4 : index
    %412 = vector.load %arg7[%c1_188, %c2_189, %c4_190] : memref<4x20x20xf32, #tpu.memory_space<vmem>>, vector<1x16x16xf32>
    %413 = vector.shape_cast %412 : vector<1x16x16xf32> to vector<16x16xf32>
    %c39 = arith.constant 39 : index
    %414 = memref.load %arg3[%c39] : memref<100xf32, #tpu.memory_space<smem>>
    %415 = vector.broadcast %414 : f32 to vector<16x16xf32>
    %416 = arith.mulf %413, %415 : vector<16x16xf32>
    %417 = arith.addf %411, %416 : vector<16x16xf32>
    %c1_191 = arith.constant 1 : index
    %c3_192 = arith.constant 3 : index
    %c0_193 = arith.constant 0 : index
    %418 = vector.load %arg7[%c1_191, %c3_192, %c0_193] : memref<4x20x20xf32, #tpu.memory_space<vmem>>, vector<1x16x16xf32>
    %419 = vector.shape_cast %418 : vector<1x16x16xf32> to vector<16x16xf32>
    %c40 = arith.constant 40 : index
    %420 = memref.load %arg3[%c40] : memref<100xf32, #tpu.memory_space<smem>>
    %421 = vector.broadcast %420 : f32 to vector<16x16xf32>
    %422 = arith.mulf %419, %421 : vector<16x16xf32>
    %423 = arith.addf %417, %422 : vector<16x16xf32>
    %c1_194 = arith.constant 1 : index
    %c3_195 = arith.constant 3 : index
    %c1_196 = arith.constant 1 : index
    %424 = vector.load %arg7[%c1_194, %c3_195, %c1_196] : memref<4x20x20xf32, #tpu.memory_space<vmem>>, vector<1x16x16xf32>
    %425 = vector.shape_cast %424 : vector<1x16x16xf32> to vector<16x16xf32>
    %c41 = arith.constant 41 : index
    %426 = memref.load %arg3[%c41] : memref<100xf32, #tpu.memory_space<smem>>
    %427 = vector.broadcast %426 : f32 to vector<16x16xf32>
    %428 = arith.mulf %425, %427 : vector<16x16xf32>
    %429 = arith.addf %423, %428 : vector<16x16xf32>
    %c1_197 = arith.constant 1 : index
    %c3_198 = arith.constant 3 : index
    %c2_199 = arith.constant 2 : index
    %430 = vector.load %arg7[%c1_197, %c3_198, %c2_199] : memref<4x20x20xf32, #tpu.memory_space<vmem>>, vector<1x16x16xf32>
    %431 = vector.shape_cast %430 : vector<1x16x16xf32> to vector<16x16xf32>
    %c42 = arith.constant 42 : index
    %432 = memref.load %arg3[%c42] : memref<100xf32, #tpu.memory_space<smem>>
    %433 = vector.broadcast %432 : f32 to vector<16x16xf32>
    %434 = arith.mulf %431, %433 : vector<16x16xf32>
    %435 = arith.addf %429, %434 : vector<16x16xf32>
    %c1_200 = arith.constant 1 : index
    %c3_201 = arith.constant 3 : index
    %c3_202 = arith.constant 3 : index
    %436 = vector.load %arg7[%c1_200, %c3_201, %c3_202] : memref<4x20x20xf32, #tpu.memory_space<vmem>>, vector<1x16x16xf32>
    %437 = vector.shape_cast %436 : vector<1x16x16xf32> to vector<16x16xf32>
    %c43 = arith.constant 43 : index
    %438 = memref.load %arg3[%c43] : memref<100xf32, #tpu.memory_space<smem>>
    %439 = vector.broadcast %438 : f32 to vector<16x16xf32>
    %440 = arith.mulf %437, %439 : vector<16x16xf32>
    %441 = arith.addf %435, %440 : vector<16x16xf32>
    %c1_203 = arith.constant 1 : index
    %c3_204 = arith.constant 3 : index
    %c4_205 = arith.constant 4 : index
    %442 = vector.load %arg7[%c1_203, %c3_204, %c4_205] : memref<4x20x20xf32, #tpu.memory_space<vmem>>, vector<1x16x16xf32>
    %443 = vector.shape_cast %442 : vector<1x16x16xf32> to vector<16x16xf32>
    %c44 = arith.constant 44 : index
    %444 = memref.load %arg3[%c44] : memref<100xf32, #tpu.memory_space<smem>>
    %445 = vector.broadcast %444 : f32 to vector<16x16xf32>
    %446 = arith.mulf %443, %445 : vector<16x16xf32>
    %447 = arith.addf %441, %446 : vector<16x16xf32>
    %c1_206 = arith.constant 1 : index
    %c4_207 = arith.constant 4 : index
    %c0_208 = arith.constant 0 : index
    %448 = vector.load %arg7[%c1_206, %c4_207, %c0_208] : memref<4x20x20xf32, #tpu.memory_space<vmem>>, vector<1x16x16xf32>
    %449 = vector.shape_cast %448 : vector<1x16x16xf32> to vector<16x16xf32>
    %c45 = arith.constant 45 : index
    %450 = memref.load %arg3[%c45] : memref<100xf32, #tpu.memory_space<smem>>
    %451 = vector.broadcast %450 : f32 to vector<16x16xf32>
    %452 = arith.mulf %449, %451 : vector<16x16xf32>
    %453 = arith.addf %447, %452 : vector<16x16xf32>
    %c1_209 = arith.constant 1 : index
    %c4_210 = arith.constant 4 : index
    %c1_211 = arith.constant 1 : index
    %454 = vector.load %arg7[%c1_209, %c4_210, %c1_211] : memref<4x20x20xf32, #tpu.memory_space<vmem>>, vector<1x16x16xf32>
    %455 = vector.shape_cast %454 : vector<1x16x16xf32> to vector<16x16xf32>
    %c46 = arith.constant 46 : index
    %456 = memref.load %arg3[%c46] : memref<100xf32, #tpu.memory_space<smem>>
    %457 = vector.broadcast %456 : f32 to vector<16x16xf32>
    %458 = arith.mulf %455, %457 : vector<16x16xf32>
    %459 = arith.addf %453, %458 : vector<16x16xf32>
    %c1_212 = arith.constant 1 : index
    %c4_213 = arith.constant 4 : index
    %c2_214 = arith.constant 2 : index
    %460 = vector.load %arg7[%c1_212, %c4_213, %c2_214] : memref<4x20x20xf32, #tpu.memory_space<vmem>>, vector<1x16x16xf32>
    %461 = vector.shape_cast %460 : vector<1x16x16xf32> to vector<16x16xf32>
    %c47 = arith.constant 47 : index
    %462 = memref.load %arg3[%c47] : memref<100xf32, #tpu.memory_space<smem>>
    %463 = vector.broadcast %462 : f32 to vector<16x16xf32>
    %464 = arith.mulf %461, %463 : vector<16x16xf32>
    %465 = arith.addf %459, %464 : vector<16x16xf32>
    %c1_215 = arith.constant 1 : index
    %c4_216 = arith.constant 4 : index
    %c3_217 = arith.constant 3 : index
    %466 = vector.load %arg7[%c1_215, %c4_216, %c3_217] : memref<4x20x20xf32, #tpu.memory_space<vmem>>, vector<1x16x16xf32>
    %467 = vector.shape_cast %466 : vector<1x16x16xf32> to vector<16x16xf32>
    %c48 = arith.constant 48 : index
    %468 = memref.load %arg3[%c48] : memref<100xf32, #tpu.memory_space<smem>>
    %469 = vector.broadcast %468 : f32 to vector<16x16xf32>
    %470 = arith.mulf %467, %469 : vector<16x16xf32>
    %471 = arith.addf %465, %470 : vector<16x16xf32>
    %c1_218 = arith.constant 1 : index
    %c4_219 = arith.constant 4 : index
    %c4_220 = arith.constant 4 : index
    %472 = vector.load %arg7[%c1_218, %c4_219, %c4_220] : memref<4x20x20xf32, #tpu.memory_space<vmem>>, vector<1x16x16xf32>
    %473 = vector.shape_cast %472 : vector<1x16x16xf32> to vector<16x16xf32>
    %c49 = arith.constant 49 : index
    %474 = memref.load %arg3[%c49] : memref<100xf32, #tpu.memory_space<smem>>
    %475 = vector.broadcast %474 : f32 to vector<16x16xf32>
    %476 = arith.mulf %473, %475 : vector<16x16xf32>
    %477 = arith.addf %471, %476 : vector<16x16xf32>
    %c1_221 = arith.constant 1 : index
    %478 = memref.load %arg4[%c1_221] : memref<4xf32, #tpu.memory_space<smem>>
    %479 = vector.broadcast %478 : f32 to vector<16x16xf32>
    %480 = arith.addf %477, %479 : vector<16x16xf32>
    %481 = arith.negf %480 : vector<16x16xf32>
    %482 = math.exp %481 : vector<16x16xf32>
    %cst_222 = arith.constant 1.000000e+00 : f32
    %483 = vector.broadcast %cst_222 : f32 to vector<16x16xf32>
    %484 = arith.addf %483, %482 : vector<16x16xf32>
    %485 = arith.divf %483, %484 : vector<16x16xf32>
    %486 = arith.mulf %480, %485 : vector<16x16xf32>
    %c0_223 = arith.constant 0 : index
    %c5_224 = arith.constant 5 : index
    %c0_225 = arith.constant 0 : index
    %c0_226 = arith.constant 0 : index
    %487 = vector.load %arg6[%c0_223, %c5_224, %c0_225, %c0_226] : memref<1x8x16x16xf32, #tpu.memory_space<vmem>>, vector<1x1x16x16xf32>
    %488 = vector.shape_cast %487 : vector<1x1x16x16xf32> to vector<16x16xf32>
    %489 = vector.shape_cast %486 : vector<16x16xf32> to vector<1x1x16x16xf32>
    tpu.vector_store %arg6[%c0_223, %c5_224, %c0_225, %c0_226], %489 {strides = array<i32>} : memref<1x8x16x16xf32, #tpu.memory_space<vmem>>, vector<1x1x16x16xf32>,
    %cst_227 = arith.constant 0.000000e+00 : f32
    %490 = vector.broadcast %cst_227 : f32 to vector<16x16xf32>
    %c2_228 = arith.constant 2 : index
    %c0_229 = arith.constant 0 : index
    %c0_230 = arith.constant 0 : index
    %491 = vector.load %arg7[%c2_228, %c0_229, %c0_230] : memref<4x20x20xf32, #tpu.memory_space<vmem>>, vector<1x16x16xf32>
    %492 = vector.shape_cast %491 : vector<1x16x16xf32> to vector<16x16xf32>
    %c50 = arith.constant 50 : index
    %493 = memref.load %arg3[%c50] : memref<100xf32, #tpu.memory_space<smem>>
    %494 = vector.broadcast %493 : f32 to vector<16x16xf32>
    %495 = arith.mulf %492, %494 : vector<16x16xf32>
    %496 = arith.addf %490, %495 : vector<16x16xf32>
    %c2_231 = arith.constant 2 : index
    %c0_232 = arith.constant 0 : index
    %c1_233 = arith.constant 1 : index
    %497 = vector.load %arg7[%c2_231, %c0_232, %c1_233] : memref<4x20x20xf32, #tpu.memory_space<vmem>>, vector<1x16x16xf32>
    %498 = vector.shape_cast %497 : vector<1x16x16xf32> to vector<16x16xf32>
    %c51 = arith.constant 51 : index
    %499 = memref.load %arg3[%c51] : memref<100xf32, #tpu.memory_space<smem>>
    %500 = vector.broadcast %499 : f32 to vector<16x16xf32>
    %501 = arith.mulf %498, %500 : vector<16x16xf32>
    %502 = arith.addf %496, %501 : vector<16x16xf32>
    %c2_234 = arith.constant 2 : index
    %c0_235 = arith.constant 0 : index
    %c2_236 = arith.constant 2 : index
    %503 = vector.load %arg7[%c2_234, %c0_235, %c2_236] : memref<4x20x20xf32, #tpu.memory_space<vmem>>, vector<1x16x16xf32>
    %504 = vector.shape_cast %503 : vector<1x16x16xf32> to vector<16x16xf32>
    %c52 = arith.constant 52 : index
    %505 = memref.load %arg3[%c52] : memref<100xf32, #tpu.memory_space<smem>>
    %506 = vector.broadcast %505 : f32 to vector<16x16xf32>
    %507 = arith.mulf %504, %506 : vector<16x16xf32>
    %508 = arith.addf %502, %507 : vector<16x16xf32>
    %c2_237 = arith.constant 2 : index
    %c0_238 = arith.constant 0 : index
    %c3_239 = arith.constant 3 : index
    %509 = vector.load %arg7[%c2_237, %c0_238, %c3_239] : memref<4x20x20xf32, #tpu.memory_space<vmem>>, vector<1x16x16xf32>
    %510 = vector.shape_cast %509 : vector<1x16x16xf32> to vector<16x16xf32>
    %c53 = arith.constant 53 : index
    %511 = memref.load %arg3[%c53] : memref<100xf32, #tpu.memory_space<smem>>
    %512 = vector.broadcast %511 : f32 to vector<16x16xf32>
    %513 = arith.mulf %510, %512 : vector<16x16xf32>
    %514 = arith.addf %508, %513 : vector<16x16xf32>
    %c2_240 = arith.constant 2 : index
    %c0_241 = arith.constant 0 : index
    %c4_242 = arith.constant 4 : index
    %515 = vector.load %arg7[%c2_240, %c0_241, %c4_242] : memref<4x20x20xf32, #tpu.memory_space<vmem>>, vector<1x16x16xf32>
    %516 = vector.shape_cast %515 : vector<1x16x16xf32> to vector<16x16xf32>
    %c54 = arith.constant 54 : index
    %517 = memref.load %arg3[%c54] : memref<100xf32, #tpu.memory_space<smem>>
    %518 = vector.broadcast %517 : f32 to vector<16x16xf32>
    %519 = arith.mulf %516, %518 : vector<16x16xf32>
    %520 = arith.addf %514, %519 : vector<16x16xf32>
    %c2_243 = arith.constant 2 : index
    %c1_244 = arith.constant 1 : index
    %c0_245 = arith.constant 0 : index
    %521 = vector.load %arg7[%c2_243, %c1_244, %c0_245] : memref<4x20x20xf32, #tpu.memory_space<vmem>>, vector<1x16x16xf32>
    %522 = vector.shape_cast %521 : vector<1x16x16xf32> to vector<16x16xf32>
    %c55 = arith.constant 55 : index
    %523 = memref.load %arg3[%c55] : memref<100xf32, #tpu.memory_space<smem>>
    %524 = vector.broadcast %523 : f32 to vector<16x16xf32>
    %525 = arith.mulf %522, %524 : vector<16x16xf32>
    %526 = arith.addf %520, %525 : vector<16x16xf32>
    %c2_246 = arith.constant 2 : index
    %c1_247 = arith.constant 1 : index
    %c1_248 = arith.constant 1 : index
    %527 = vector.load %arg7[%c2_246, %c1_247, %c1_248] : memref<4x20x20xf32, #tpu.memory_space<vmem>>, vector<1x16x16xf32>
    %528 = vector.shape_cast %527 : vector<1x16x16xf32> to vector<16x16xf32>
    %c56 = arith.constant 56 : index
    %529 = memref.load %arg3[%c56] : memref<100xf32, #tpu.memory_space<smem>>
    %530 = vector.broadcast %529 : f32 to vector<16x16xf32>
    %531 = arith.mulf %528, %530 : vector<16x16xf32>
    %532 = arith.addf %526, %531 : vector<16x16xf32>
    %c2_249 = arith.constant 2 : index
    %c1_250 = arith.constant 1 : index
    %c2_251 = arith.constant 2 : index
    %533 = vector.load %arg7[%c2_249, %c1_250, %c2_251] : memref<4x20x20xf32, #tpu.memory_space<vmem>>, vector<1x16x16xf32>
    %534 = vector.shape_cast %533 : vector<1x16x16xf32> to vector<16x16xf32>
    %c57 = arith.constant 57 : index
    %535 = memref.load %arg3[%c57] : memref<100xf32, #tpu.memory_space<smem>>
    %536 = vector.broadcast %535 : f32 to vector<16x16xf32>
    %537 = arith.mulf %534, %536 : vector<16x16xf32>
    %538 = arith.addf %532, %537 : vector<16x16xf32>
    %c2_252 = arith.constant 2 : index
    %c1_253 = arith.constant 1 : index
    %c3_254 = arith.constant 3 : index
    %539 = vector.load %arg7[%c2_252, %c1_253, %c3_254] : memref<4x20x20xf32, #tpu.memory_space<vmem>>, vector<1x16x16xf32>
    %540 = vector.shape_cast %539 : vector<1x16x16xf32> to vector<16x16xf32>
    %c58 = arith.constant 58 : index
    %541 = memref.load %arg3[%c58] : memref<100xf32, #tpu.memory_space<smem>>
    %542 = vector.broadcast %541 : f32 to vector<16x16xf32>
    %543 = arith.mulf %540, %542 : vector<16x16xf32>
    %544 = arith.addf %538, %543 : vector<16x16xf32>
    %c2_255 = arith.constant 2 : index
    %c1_256 = arith.constant 1 : index
    %c4_257 = arith.constant 4 : index
    %545 = vector.load %arg7[%c2_255, %c1_256, %c4_257] : memref<4x20x20xf32, #tpu.memory_space<vmem>>, vector<1x16x16xf32>
    %546 = vector.shape_cast %545 : vector<1x16x16xf32> to vector<16x16xf32>
    %c59 = arith.constant 59 : index
    %547 = memref.load %arg3[%c59] : memref<100xf32, #tpu.memory_space<smem>>
    %548 = vector.broadcast %547 : f32 to vector<16x16xf32>
    %549 = arith.mulf %546, %548 : vector<16x16xf32>
    %550 = arith.addf %544, %549 : vector<16x16xf32>
    %c2_258 = arith.constant 2 : index
    %c2_259 = arith.constant 2 : index
    %c0_260 = arith.constant 0 : index
    %551 = vector.load %arg7[%c2_258, %c2_259, %c0_260] : memref<4x20x20xf32, #tpu.memory_space<vmem>>, vector<1x16x16xf32>
    %552 = vector.shape_cast %551 : vector<1x16x16xf32> to vector<16x16xf32>
    %c60 = arith.constant 60 : index
    %553 = memref.load %arg3[%c60] : memref<100xf32, #tpu.memory_space<smem>>
    %554 = vector.broadcast %553 : f32 to vector<16x16xf32>
    %555 = arith.mulf %552, %554 : vector<16x16xf32>
    %556 = arith.addf %550, %555 : vector<16x16xf32>
    %c2_261 = arith.constant 2 : index
    %c2_262 = arith.constant 2 : index
    %c1_263 = arith.constant 1 : index
    %557 = vector.load %arg7[%c2_261, %c2_262, %c1_263] : memref<4x20x20xf32, #tpu.memory_space<vmem>>, vector<1x16x16xf32>
    %558 = vector.shape_cast %557 : vector<1x16x16xf32> to vector<16x16xf32>
    %c61 = arith.constant 61 : index
    %559 = memref.load %arg3[%c61] : memref<100xf32, #tpu.memory_space<smem>>
    %560 = vector.broadcast %559 : f32 to vector<16x16xf32>
    %561 = arith.mulf %558, %560 : vector<16x16xf32>
    %562 = arith.addf %556, %561 : vector<16x16xf32>
    %c2_264 = arith.constant 2 : index
    %c2_265 = arith.constant 2 : index
    %c2_266 = arith.constant 2 : index
    %563 = vector.load %arg7[%c2_264, %c2_265, %c2_266] : memref<4x20x20xf32, #tpu.memory_space<vmem>>, vector<1x16x16xf32>
    %564 = vector.shape_cast %563 : vector<1x16x16xf32> to vector<16x16xf32>
    %c62 = arith.constant 62 : index
    %565 = memref.load %arg3[%c62] : memref<100xf32, #tpu.memory_space<smem>>
    %566 = vector.broadcast %565 : f32 to vector<16x16xf32>
    %567 = arith.mulf %564, %566 : vector<16x16xf32>
    %568 = arith.addf %562, %567 : vector<16x16xf32>
    %c2_267 = arith.constant 2 : index
    %c2_268 = arith.constant 2 : index
    %c3_269 = arith.constant 3 : index
    %569 = vector.load %arg7[%c2_267, %c2_268, %c3_269] : memref<4x20x20xf32, #tpu.memory_space<vmem>>, vector<1x16x16xf32>
    %570 = vector.shape_cast %569 : vector<1x16x16xf32> to vector<16x16xf32>
    %c63 = arith.constant 63 : index
    %571 = memref.load %arg3[%c63] : memref<100xf32, #tpu.memory_space<smem>>
    %572 = vector.broadcast %571 : f32 to vector<16x16xf32>
    %573 = arith.mulf %570, %572 : vector<16x16xf32>
    %574 = arith.addf %568, %573 : vector<16x16xf32>
    %c2_270 = arith.constant 2 : index
    %c2_271 = arith.constant 2 : index
    %c4_272 = arith.constant 4 : index
    %575 = vector.load %arg7[%c2_270, %c2_271, %c4_272] : memref<4x20x20xf32, #tpu.memory_space<vmem>>, vector<1x16x16xf32>
    %576 = vector.shape_cast %575 : vector<1x16x16xf32> to vector<16x16xf32>
    %c64 = arith.constant 64 : index
    %577 = memref.load %arg3[%c64] : memref<100xf32, #tpu.memory_space<smem>>
    %578 = vector.broadcast %577 : f32 to vector<16x16xf32>
    %579 = arith.mulf %576, %578 : vector<16x16xf32>
    %580 = arith.addf %574, %579 : vector<16x16xf32>
    %c2_273 = arith.constant 2 : index
    %c3_274 = arith.constant 3 : index
    %c0_275 = arith.constant 0 : index
    %581 = vector.load %arg7[%c2_273, %c3_274, %c0_275] : memref<4x20x20xf32, #tpu.memory_space<vmem>>, vector<1x16x16xf32>
    %582 = vector.shape_cast %581 : vector<1x16x16xf32> to vector<16x16xf32>
    %c65 = arith.constant 65 : index
    %583 = memref.load %arg3[%c65] : memref<100xf32, #tpu.memory_space<smem>>
    %584 = vector.broadcast %583 : f32 to vector<16x16xf32>
    %585 = arith.mulf %582, %584 : vector<16x16xf32>
    %586 = arith.addf %580, %585 : vector<16x16xf32>
    %c2_276 = arith.constant 2 : index
    %c3_277 = arith.constant 3 : index
    %c1_278 = arith.constant 1 : index
    %587 = vector.load %arg7[%c2_276, %c3_277, %c1_278] : memref<4x20x20xf32, #tpu.memory_space<vmem>>, vector<1x16x16xf32>
    %588 = vector.shape_cast %587 : vector<1x16x16xf32> to vector<16x16xf32>
    %c66 = arith.constant 66 : index
    %589 = memref.load %arg3[%c66] : memref<100xf32, #tpu.memory_space<smem>>
    %590 = vector.broadcast %589 : f32 to vector<16x16xf32>
    %591 = arith.mulf %588, %590 : vector<16x16xf32>
    %592 = arith.addf %586, %591 : vector<16x16xf32>
    %c2_279 = arith.constant 2 : index
    %c3_280 = arith.constant 3 : index
    %c2_281 = arith.constant 2 : index
    %593 = vector.load %arg7[%c2_279, %c3_280, %c2_281] : memref<4x20x20xf32, #tpu.memory_space<vmem>>, vector<1x16x16xf32>
    %594 = vector.shape_cast %593 : vector<1x16x16xf32> to vector<16x16xf32>
    %c67 = arith.constant 67 : index
    %595 = memref.load %arg3[%c67] : memref<100xf32, #tpu.memory_space<smem>>
    %596 = vector.broadcast %595 : f32 to vector<16x16xf32>
    %597 = arith.mulf %594, %596 : vector<16x16xf32>
    %598 = arith.addf %592, %597 : vector<16x16xf32>
    %c2_282 = arith.constant 2 : index
    %c3_283 = arith.constant 3 : index
    %c3_284 = arith.constant 3 : index
    %599 = vector.load %arg7[%c2_282, %c3_283, %c3_284] : memref<4x20x20xf32, #tpu.memory_space<vmem>>, vector<1x16x16xf32>
    %600 = vector.shape_cast %599 : vector<1x16x16xf32> to vector<16x16xf32>
    %c68 = arith.constant 68 : index
    %601 = memref.load %arg3[%c68] : memref<100xf32, #tpu.memory_space<smem>>
    %602 = vector.broadcast %601 : f32 to vector<16x16xf32>
    %603 = arith.mulf %600, %602 : vector<16x16xf32>
    %604 = arith.addf %598, %603 : vector<16x16xf32>
    %c2_285 = arith.constant 2 : index
    %c3_286 = arith.constant 3 : index
    %c4_287 = arith.constant 4 : index
    %605 = vector.load %arg7[%c2_285, %c3_286, %c4_287] : memref<4x20x20xf32, #tpu.memory_space<vmem>>, vector<1x16x16xf32>
    %606 = vector.shape_cast %605 : vector<1x16x16xf32> to vector<16x16xf32>
    %c69 = arith.constant 69 : index
    %607 = memref.load %arg3[%c69] : memref<100xf32, #tpu.memory_space<smem>>
    %608 = vector.broadcast %607 : f32 to vector<16x16xf32>
    %609 = arith.mulf %606, %608 : vector<16x16xf32>
    %610 = arith.addf %604, %609 : vector<16x16xf32>
    %c2_288 = arith.constant 2 : index
    %c4_289 = arith.constant 4 : index
    %c0_290 = arith.constant 0 : index
    %611 = vector.load %arg7[%c2_288, %c4_289, %c0_290] : memref<4x20x20xf32, #tpu.memory_space<vmem>>, vector<1x16x16xf32>
    %612 = vector.shape_cast %611 : vector<1x16x16xf32> to vector<16x16xf32>
    %c70 = arith.constant 70 : index
    %613 = memref.load %arg3[%c70] : memref<100xf32, #tpu.memory_space<smem>>
    %614 = vector.broadcast %613 : f32 to vector<16x16xf32>
    %615 = arith.mulf %612, %614 : vector<16x16xf32>
    %616 = arith.addf %610, %615 : vector<16x16xf32>
    %c2_291 = arith.constant 2 : index
    %c4_292 = arith.constant 4 : index
    %c1_293 = arith.constant 1 : index
    %617 = vector.load %arg7[%c2_291, %c4_292, %c1_293] : memref<4x20x20xf32, #tpu.memory_space<vmem>>, vector<1x16x16xf32>
    %618 = vector.shape_cast %617 : vector<1x16x16xf32> to vector<16x16xf32>
    %c71 = arith.constant 71 : index
    %619 = memref.load %arg3[%c71] : memref<100xf32, #tpu.memory_space<smem>>
    %620 = vector.broadcast %619 : f32 to vector<16x16xf32>
    %621 = arith.mulf %618, %620 : vector<16x16xf32>
    %622 = arith.addf %616, %621 : vector<16x16xf32>
    %c2_294 = arith.constant 2 : index
    %c4_295 = arith.constant 4 : index
    %c2_296 = arith.constant 2 : index
    %623 = vector.load %arg7[%c2_294, %c4_295, %c2_296] : memref<4x20x20xf32, #tpu.memory_space<vmem>>, vector<1x16x16xf32>
    %624 = vector.shape_cast %623 : vector<1x16x16xf32> to vector<16x16xf32>
    %c72 = arith.constant 72 : index
    %625 = memref.load %arg3[%c72] : memref<100xf32, #tpu.memory_space<smem>>
    %626 = vector.broadcast %625 : f32 to vector<16x16xf32>
    %627 = arith.mulf %624, %626 : vector<16x16xf32>
    %628 = arith.addf %622, %627 : vector<16x16xf32>
    %c2_297 = arith.constant 2 : index
    %c4_298 = arith.constant 4 : index
    %c3_299 = arith.constant 3 : index
    %629 = vector.load %arg7[%c2_297, %c4_298, %c3_299] : memref<4x20x20xf32, #tpu.memory_space<vmem>>, vector<1x16x16xf32>
    %630 = vector.shape_cast %629 : vector<1x16x16xf32> to vector<16x16xf32>
    %c73 = arith.constant 73 : index
    %631 = memref.load %arg3[%c73] : memref<100xf32, #tpu.memory_space<smem>>
    %632 = vector.broadcast %631 : f32 to vector<16x16xf32>
    %633 = arith.mulf %630, %632 : vector<16x16xf32>
    %634 = arith.addf %628, %633 : vector<16x16xf32>
    %c2_300 = arith.constant 2 : index
    %c4_301 = arith.constant 4 : index
    %c4_302 = arith.constant 4 : index
    %635 = vector.load %arg7[%c2_300, %c4_301, %c4_302] : memref<4x20x20xf32, #tpu.memory_space<vmem>>, vector<1x16x16xf32>
    %636 = vector.shape_cast %635 : vector<1x16x16xf32> to vector<16x16xf32>
    %c74 = arith.constant 74 : index
    %637 = memref.load %arg3[%c74] : memref<100xf32, #tpu.memory_space<smem>>
    %638 = vector.broadcast %637 : f32 to vector<16x16xf32>
    %639 = arith.mulf %636, %638 : vector<16x16xf32>
    %640 = arith.addf %634, %639 : vector<16x16xf32>
    %c2_303 = arith.constant 2 : index
    %641 = memref.load %arg4[%c2_303] : memref<4xf32, #tpu.memory_space<smem>>
    %642 = vector.broadcast %641 : f32 to vector<16x16xf32>
    %643 = arith.addf %640, %642 : vector<16x16xf32>
    %644 = arith.negf %643 : vector<16x16xf32>
    %645 = math.exp %644 : vector<16x16xf32>
    %cst_304 = arith.constant 1.000000e+00 : f32
    %646 = vector.broadcast %cst_304 : f32 to vector<16x16xf32>
    %647 = arith.addf %646, %645 : vector<16x16xf32>
    %648 = arith.divf %646, %647 : vector<16x16xf32>
    %649 = arith.mulf %643, %648 : vector<16x16xf32>
    %c0_305 = arith.constant 0 : index
    %c6_306 = arith.constant 6 : index
    %c0_307 = arith.constant 0 : index
    %c0_308 = arith.constant 0 : index
    %650 = vector.load %arg6[%c0_305, %c6_306, %c0_307, %c0_308] : memref<1x8x16x16xf32, #tpu.memory_space<vmem>>, vector<1x1x16x16xf32>
    %651 = vector.shape_cast %650 : vector<1x1x16x16xf32> to vector<16x16xf32>
    %652 = vector.shape_cast %649 : vector<16x16xf32> to vector<1x1x16x16xf32>
    tpu.vector_store %arg6[%c0_305, %c6_306, %c0_307, %c0_308], %652 {strides = array<i32>} : memref<1x8x16x16xf32, #tpu.memory_space<vmem>>, vector<1x1x16x16xf32>,
    %cst_309 = arith.constant 0.000000e+00 : f32
    %653 = vector.broadcast %cst_309 : f32 to vector<16x16xf32>
    %c3_310 = arith.constant 3 : index
    %c0_311 = arith.constant 0 : index
    %c0_312 = arith.constant 0 : index
    %654 = vector.load %arg7[%c3_310, %c0_311, %c0_312] : memref<4x20x20xf32, #tpu.memory_space<vmem>>, vector<1x16x16xf32>
    %655 = vector.shape_cast %654 : vector<1x16x16xf32> to vector<16x16xf32>
    %c75 = arith.constant 75 : index
    %656 = memref.load %arg3[%c75] : memref<100xf32, #tpu.memory_space<smem>>
    %657 = vector.broadcast %656 : f32 to vector<16x16xf32>
    %658 = arith.mulf %655, %657 : vector<16x16xf32>
    %659 = arith.addf %653, %658 : vector<16x16xf32>
    %c3_313 = arith.constant 3 : index
    %c0_314 = arith.constant 0 : index
    %c1_315 = arith.constant 1 : index
    %660 = vector.load %arg7[%c3_313, %c0_314, %c1_315] : memref<4x20x20xf32, #tpu.memory_space<vmem>>, vector<1x16x16xf32>
    %661 = vector.shape_cast %660 : vector<1x16x16xf32> to vector<16x16xf32>
    %c76 = arith.constant 76 : index
    %662 = memref.load %arg3[%c76] : memref<100xf32, #tpu.memory_space<smem>>
    %663 = vector.broadcast %662 : f32 to vector<16x16xf32>
    %664 = arith.mulf %661, %663 : vector<16x16xf32>
    %665 = arith.addf %659, %664 : vector<16x16xf32>
    %c3_316 = arith.constant 3 : index
    %c0_317 = arith.constant 0 : index
    %c2_318 = arith.constant 2 : index
    %666 = vector.load %arg7[%c3_316, %c0_317, %c2_318] : memref<4x20x20xf32, #tpu.memory_space<vmem>>, vector<1x16x16xf32>
    %667 = vector.shape_cast %666 : vector<1x16x16xf32> to vector<16x16xf32>
    %c77 = arith.constant 77 : index
    %668 = memref.load %arg3[%c77] : memref<100xf32, #tpu.memory_space<smem>>
    %669 = vector.broadcast %668 : f32 to vector<16x16xf32>
    %670 = arith.mulf %667, %669 : vector<16x16xf32>
    %671 = arith.addf %665, %670 : vector<16x16xf32>
    %c3_319 = arith.constant 3 : index
    %c0_320 = arith.constant 0 : index
    %c3_321 = arith.constant 3 : index
    %672 = vector.load %arg7[%c3_319, %c0_320, %c3_321] : memref<4x20x20xf32, #tpu.memory_space<vmem>>, vector<1x16x16xf32>
    %673 = vector.shape_cast %672 : vector<1x16x16xf32> to vector<16x16xf32>
    %c78 = arith.constant 78 : index
    %674 = memref.load %arg3[%c78] : memref<100xf32, #tpu.memory_space<smem>>
    %675 = vector.broadcast %674 : f32 to vector<16x16xf32>
    %676 = arith.mulf %673, %675 : vector<16x16xf32>
    %677 = arith.addf %671, %676 : vector<16x16xf32>
    %c3_322 = arith.constant 3 : index
    %c0_323 = arith.constant 0 : index
    %c4_324 = arith.constant 4 : index
    %678 = vector.load %arg7[%c3_322, %c0_323, %c4_324] : memref<4x20x20xf32, #tpu.memory_space<vmem>>, vector<1x16x16xf32>
    %679 = vector.shape_cast %678 : vector<1x16x16xf32> to vector<16x16xf32>
    %c79 = arith.constant 79 : index
    %680 = memref.load %arg3[%c79] : memref<100xf32, #tpu.memory_space<smem>>
    %681 = vector.broadcast %680 : f32 to vector<16x16xf32>
    %682 = arith.mulf %679, %681 : vector<16x16xf32>
    %683 = arith.addf %677, %682 : vector<16x16xf32>
    %c3_325 = arith.constant 3 : index
    %c1_326 = arith.constant 1 : index
    %c0_327 = arith.constant 0 : index
    %684 = vector.load %arg7[%c3_325, %c1_326, %c0_327] : memref<4x20x20xf32, #tpu.memory_space<vmem>>, vector<1x16x16xf32>
    %685 = vector.shape_cast %684 : vector<1x16x16xf32> to vector<16x16xf32>
    %c80 = arith.constant 80 : index
    %686 = memref.load %arg3[%c80] : memref<100xf32, #tpu.memory_space<smem>>
    %687 = vector.broadcast %686 : f32 to vector<16x16xf32>
    %688 = arith.mulf %685, %687 : vector<16x16xf32>
    %689 = arith.addf %683, %688 : vector<16x16xf32>
    %c3_328 = arith.constant 3 : index
    %c1_329 = arith.constant 1 : index
    %c1_330 = arith.constant 1 : index
    %690 = vector.load %arg7[%c3_328, %c1_329, %c1_330] : memref<4x20x20xf32, #tpu.memory_space<vmem>>, vector<1x16x16xf32>
    %691 = vector.shape_cast %690 : vector<1x16x16xf32> to vector<16x16xf32>
    %c81 = arith.constant 81 : index
    %692 = memref.load %arg3[%c81] : memref<100xf32, #tpu.memory_space<smem>>
    %693 = vector.broadcast %692 : f32 to vector<16x16xf32>
    %694 = arith.mulf %691, %693 : vector<16x16xf32>
    %695 = arith.addf %689, %694 : vector<16x16xf32>
    %c3_331 = arith.constant 3 : index
    %c1_332 = arith.constant 1 : index
    %c2_333 = arith.constant 2 : index
    %696 = vector.load %arg7[%c3_331, %c1_332, %c2_333] : memref<4x20x20xf32, #tpu.memory_space<vmem>>, vector<1x16x16xf32>
    %697 = vector.shape_cast %696 : vector<1x16x16xf32> to vector<16x16xf32>
    %c82 = arith.constant 82 : index
    %698 = memref.load %arg3[%c82] : memref<100xf32, #tpu.memory_space<smem>>
    %699 = vector.broadcast %698 : f32 to vector<16x16xf32>
    %700 = arith.mulf %697, %699 : vector<16x16xf32>
    %701 = arith.addf %695, %700 : vector<16x16xf32>
    %c3_334 = arith.constant 3 : index
    %c1_335 = arith.constant 1 : index
    %c3_336 = arith.constant 3 : index
    %702 = vector.load %arg7[%c3_334, %c1_335, %c3_336] : memref<4x20x20xf32, #tpu.memory_space<vmem>>, vector<1x16x16xf32>
    %703 = vector.shape_cast %702 : vector<1x16x16xf32> to vector<16x16xf32>
    %c83 = arith.constant 83 : index
    %704 = memref.load %arg3[%c83] : memref<100xf32, #tpu.memory_space<smem>>
    %705 = vector.broadcast %704 : f32 to vector<16x16xf32>
    %706 = arith.mulf %703, %705 : vector<16x16xf32>
    %707 = arith.addf %701, %706 : vector<16x16xf32>
    %c3_337 = arith.constant 3 : index
    %c1_338 = arith.constant 1 : index
    %c4_339 = arith.constant 4 : index
    %708 = vector.load %arg7[%c3_337, %c1_338, %c4_339] : memref<4x20x20xf32, #tpu.memory_space<vmem>>, vector<1x16x16xf32>
    %709 = vector.shape_cast %708 : vector<1x16x16xf32> to vector<16x16xf32>
    %c84 = arith.constant 84 : index
    %710 = memref.load %arg3[%c84] : memref<100xf32, #tpu.memory_space<smem>>
    %711 = vector.broadcast %710 : f32 to vector<16x16xf32>
    %712 = arith.mulf %709, %711 : vector<16x16xf32>
    %713 = arith.addf %707, %712 : vector<16x16xf32>
    %c3_340 = arith.constant 3 : index
    %c2_341 = arith.constant 2 : index
    %c0_342 = arith.constant 0 : index
    %714 = vector.load %arg7[%c3_340, %c2_341, %c0_342] : memref<4x20x20xf32, #tpu.memory_space<vmem>>, vector<1x16x16xf32>
    %715 = vector.shape_cast %714 : vector<1x16x16xf32> to vector<16x16xf32>
    %c85 = arith.constant 85 : index
    %716 = memref.load %arg3[%c85] : memref<100xf32, #tpu.memory_space<smem>>
    %717 = vector.broadcast %716 : f32 to vector<16x16xf32>
    %718 = arith.mulf %715, %717 : vector<16x16xf32>
    %719 = arith.addf %713, %718 : vector<16x16xf32>
    %c3_343 = arith.constant 3 : index
    %c2_344 = arith.constant 2 : index
    %c1_345 = arith.constant 1 : index
    %720 = vector.load %arg7[%c3_343, %c2_344, %c1_345] : memref<4x20x20xf32, #tpu.memory_space<vmem>>, vector<1x16x16xf32>
    %721 = vector.shape_cast %720 : vector<1x16x16xf32> to vector<16x16xf32>
    %c86 = arith.constant 86 : index
    %722 = memref.load %arg3[%c86] : memref<100xf32, #tpu.memory_space<smem>>
    %723 = vector.broadcast %722 : f32 to vector<16x16xf32>
    %724 = arith.mulf %721, %723 : vector<16x16xf32>
    %725 = arith.addf %719, %724 : vector<16x16xf32>
    %c3_346 = arith.constant 3 : index
    %c2_347 = arith.constant 2 : index
    %c2_348 = arith.constant 2 : index
    %726 = vector.load %arg7[%c3_346, %c2_347, %c2_348] : memref<4x20x20xf32, #tpu.memory_space<vmem>>, vector<1x16x16xf32>
    %727 = vector.shape_cast %726 : vector<1x16x16xf32> to vector<16x16xf32>
    %c87 = arith.constant 87 : index
    %728 = memref.load %arg3[%c87] : memref<100xf32, #tpu.memory_space<smem>>
    %729 = vector.broadcast %728 : f32 to vector<16x16xf32>
    %730 = arith.mulf %727, %729 : vector<16x16xf32>
    %731 = arith.addf %725, %730 : vector<16x16xf32>
    %c3_349 = arith.constant 3 : index
    %c2_350 = arith.constant 2 : index
    %c3_351 = arith.constant 3 : index
    %732 = vector.load %arg7[%c3_349, %c2_350, %c3_351] : memref<4x20x20xf32, #tpu.memory_space<vmem>>, vector<1x16x16xf32>
    %733 = vector.shape_cast %732 : vector<1x16x16xf32> to vector<16x16xf32>
    %c88 = arith.constant 88 : index
    %734 = memref.load %arg3[%c88] : memref<100xf32, #tpu.memory_space<smem>>
    %735 = vector.broadcast %734 : f32 to vector<16x16xf32>
    %736 = arith.mulf %733, %735 : vector<16x16xf32>
    %737 = arith.addf %731, %736 : vector<16x16xf32>
    %c3_352 = arith.constant 3 : index
    %c2_353 = arith.constant 2 : index
    %c4_354 = arith.constant 4 : index
    %738 = vector.load %arg7[%c3_352, %c2_353, %c4_354] : memref<4x20x20xf32, #tpu.memory_space<vmem>>, vector<1x16x16xf32>
    %739 = vector.shape_cast %738 : vector<1x16x16xf32> to vector<16x16xf32>
    %c89 = arith.constant 89 : index
    %740 = memref.load %arg3[%c89] : memref<100xf32, #tpu.memory_space<smem>>
    %741 = vector.broadcast %740 : f32 to vector<16x16xf32>
    %742 = arith.mulf %739, %741 : vector<16x16xf32>
    %743 = arith.addf %737, %742 : vector<16x16xf32>
    %c3_355 = arith.constant 3 : index
    %c3_356 = arith.constant 3 : index
    %c0_357 = arith.constant 0 : index
    %744 = vector.load %arg7[%c3_355, %c3_356, %c0_357] : memref<4x20x20xf32, #tpu.memory_space<vmem>>, vector<1x16x16xf32>
    %745 = vector.shape_cast %744 : vector<1x16x16xf32> to vector<16x16xf32>
    %c90 = arith.constant 90 : index
    %746 = memref.load %arg3[%c90] : memref<100xf32, #tpu.memory_space<smem>>
    %747 = vector.broadcast %746 : f32 to vector<16x16xf32>
    %748 = arith.mulf %745, %747 : vector<16x16xf32>
    %749 = arith.addf %743, %748 : vector<16x16xf32>
    %c3_358 = arith.constant 3 : index
    %c3_359 = arith.constant 3 : index
    %c1_360 = arith.constant 1 : index
    %750 = vector.load %arg7[%c3_358, %c3_359, %c1_360] : memref<4x20x20xf32, #tpu.memory_space<vmem>>, vector<1x16x16xf32>
    %751 = vector.shape_cast %750 : vector<1x16x16xf32> to vector<16x16xf32>
    %c91 = arith.constant 91 : index
    %752 = memref.load %arg3[%c91] : memref<100xf32, #tpu.memory_space<smem>>
    %753 = vector.broadcast %752 : f32 to vector<16x16xf32>
    %754 = arith.mulf %751, %753 : vector<16x16xf32>
    %755 = arith.addf %749, %754 : vector<16x16xf32>
    %c3_361 = arith.constant 3 : index
    %c3_362 = arith.constant 3 : index
    %c2_363 = arith.constant 2 : index
    %756 = vector.load %arg7[%c3_361, %c3_362, %c2_363] : memref<4x20x20xf32, #tpu.memory_space<vmem>>, vector<1x16x16xf32>
    %757 = vector.shape_cast %756 : vector<1x16x16xf32> to vector<16x16xf32>
    %c92 = arith.constant 92 : index
    %758 = memref.load %arg3[%c92] : memref<100xf32, #tpu.memory_space<smem>>
    %759 = vector.broadcast %758 : f32 to vector<16x16xf32>
    %760 = arith.mulf %757, %759 : vector<16x16xf32>
    %761 = arith.addf %755, %760 : vector<16x16xf32>
    %c3_364 = arith.constant 3 : index
    %c3_365 = arith.constant 3 : index
    %c3_366 = arith.constant 3 : index
    %762 = vector.load %arg7[%c3_364, %c3_365, %c3_366] : memref<4x20x20xf32, #tpu.memory_space<vmem>>, vector<1x16x16xf32>
    %763 = vector.shape_cast %762 : vector<1x16x16xf32> to vector<16x16xf32>
    %c93 = arith.constant 93 : index
    %764 = memref.load %arg3[%c93] : memref<100xf32, #tpu.memory_space<smem>>
    %765 = vector.broadcast %764 : f32 to vector<16x16xf32>
    %766 = arith.mulf %763, %765 : vector<16x16xf32>
    %767 = arith.addf %761, %766 : vector<16x16xf32>
    %c3_367 = arith.constant 3 : index
    %c3_368 = arith.constant 3 : index
    %c4_369 = arith.constant 4 : index
    %768 = vector.load %arg7[%c3_367, %c3_368, %c4_369] : memref<4x20x20xf32, #tpu.memory_space<vmem>>, vector<1x16x16xf32>
    %769 = vector.shape_cast %768 : vector<1x16x16xf32> to vector<16x16xf32>
    %c94 = arith.constant 94 : index
    %770 = memref.load %arg3[%c94] : memref<100xf32, #tpu.memory_space<smem>>
    %771 = vector.broadcast %770 : f32 to vector<16x16xf32>
    %772 = arith.mulf %769, %771 : vector<16x16xf32>
    %773 = arith.addf %767, %772 : vector<16x16xf32>
    %c3_370 = arith.constant 3 : index
    %c4_371 = arith.constant 4 : index
    %c0_372 = arith.constant 0 : index
    %774 = vector.load %arg7[%c3_370, %c4_371, %c0_372] : memref<4x20x20xf32, #tpu.memory_space<vmem>>, vector<1x16x16xf32>
    %775 = vector.shape_cast %774 : vector<1x16x16xf32> to vector<16x16xf32>
    %c95 = arith.constant 95 : index
    %776 = memref.load %arg3[%c95] : memref<100xf32, #tpu.memory_space<smem>>
    %777 = vector.broadcast %776 : f32 to vector<16x16xf32>
    %778 = arith.mulf %775, %777 : vector<16x16xf32>
    %779 = arith.addf %773, %778 : vector<16x16xf32>
    %c3_373 = arith.constant 3 : index
    %c4_374 = arith.constant 4 : index
    %c1_375 = arith.constant 1 : index
    %780 = vector.load %arg7[%c3_373, %c4_374, %c1_375] : memref<4x20x20xf32, #tpu.memory_space<vmem>>, vector<1x16x16xf32>
    %781 = vector.shape_cast %780 : vector<1x16x16xf32> to vector<16x16xf32>
    %c96 = arith.constant 96 : index
    %782 = memref.load %arg3[%c96] : memref<100xf32, #tpu.memory_space<smem>>
    %783 = vector.broadcast %782 : f32 to vector<16x16xf32>
    %784 = arith.mulf %781, %783 : vector<16x16xf32>
    %785 = arith.addf %779, %784 : vector<16x16xf32>
    %c3_376 = arith.constant 3 : index
    %c4_377 = arith.constant 4 : index
    %c2_378 = arith.constant 2 : index
    %786 = vector.load %arg7[%c3_376, %c4_377, %c2_378] : memref<4x20x20xf32, #tpu.memory_space<vmem>>, vector<1x16x16xf32>
    %787 = vector.shape_cast %786 : vector<1x16x16xf32> to vector<16x16xf32>
    %c97 = arith.constant 97 : index
    %788 = memref.load %arg3[%c97] : memref<100xf32, #tpu.memory_space<smem>>
    %789 = vector.broadcast %788 : f32 to vector<16x16xf32>
    %790 = arith.mulf %787, %789 : vector<16x16xf32>
    %791 = arith.addf %785, %790 : vector<16x16xf32>
    %c3_379 = arith.constant 3 : index
    %c4_380 = arith.constant 4 : index
    %c3_381 = arith.constant 3 : index
    %792 = vector.load %arg7[%c3_379, %c4_380, %c3_381] : memref<4x20x20xf32, #tpu.memory_space<vmem>>, vector<1x16x16xf32>
    %793 = vector.shape_cast %792 : vector<1x16x16xf32> to vector<16x16xf32>
    %c98 = arith.constant 98 : index
    %794 = memref.load %arg3[%c98] : memref<100xf32, #tpu.memory_space<smem>>
    %795 = vector.broadcast %794 : f32 to vector<16x16xf32>
    %796 = arith.mulf %793, %795 : vector<16x16xf32>
    %797 = arith.addf %791, %796 : vector<16x16xf32>
    %c3_382 = arith.constant 3 : index
    %c4_383 = arith.constant 4 : index
    %c4_384 = arith.constant 4 : index
    %798 = vector.load %arg7[%c3_382, %c4_383, %c4_384] : memref<4x20x20xf32, #tpu.memory_space<vmem>>, vector<1x16x16xf32>
    %799 = vector.shape_cast %798 : vector<1x16x16xf32> to vector<16x16xf32>
    %c99 = arith.constant 99 : index
    %800 = memref.load %arg3[%c99] : memref<100xf32, #tpu.memory_space<smem>>
    %801 = vector.broadcast %800 : f32 to vector<16x16xf32>
    %802 = arith.mulf %799, %801 : vector<16x16xf32>
    %803 = arith.addf %797, %802 : vector<16x16xf32>
    %c3_385 = arith.constant 3 : index
    %804 = memref.load %arg4[%c3_385] : memref<4xf32, #tpu.memory_space<smem>>
    %805 = vector.broadcast %804 : f32 to vector<16x16xf32>
    %806 = arith.addf %803, %805 : vector<16x16xf32>
    %807 = arith.negf %806 : vector<16x16xf32>
    %808 = math.exp %807 : vector<16x16xf32>
    %cst_386 = arith.constant 1.000000e+00 : f32
    %809 = vector.broadcast %cst_386 : f32 to vector<16x16xf32>
    %810 = arith.addf %809, %808 : vector<16x16xf32>
    %811 = arith.divf %809, %810 : vector<16x16xf32>
    %812 = arith.mulf %806, %811 : vector<16x16xf32>
    %c0_387 = arith.constant 0 : index
    %c7_388 = arith.constant 7 : index
    %c0_389 = arith.constant 0 : index
    %c0_390 = arith.constant 0 : index
    %813 = vector.load %arg6[%c0_387, %c7_388, %c0_389, %c0_390] : memref<1x8x16x16xf32, #tpu.memory_space<vmem>>, vector<1x1x16x16xf32>
    %814 = vector.shape_cast %813 : vector<1x1x16x16xf32> to vector<16x16xf32>
    %815 = vector.shape_cast %812 : vector<16x16xf32> to vector<1x1x16x16xf32>
    tpu.vector_store %arg6[%c0_387, %c7_388, %c0_389, %c0_390], %815 {strides = array<i32>} : memref<1x8x16x16xf32, #tpu.memory_space<vmem>>, vector<1x1x16x16xf32>,
    return
  }
  func.func @transform_0(%arg0: i32, %arg1: memref<16xf32, #tpu.memory_space<smem>>, %arg2: memref<4xf32, #tpu.memory_space<smem>>, %arg3: memref<100xf32, #tpu.memory_space<smem>>, %arg4: memref<4xf32, #tpu.memory_space<smem>>) -> (i32, i32, i32, i32) {
    %c0_i32 = arith.constant 0 : i32
    %c0_i32_0 = arith.constant 0 : i32
    %c0_i32_1 = arith.constant 0 : i32
    %c0_i32_2 = arith.constant 0 : i32
    return %arg0, %c0_i32, %c0_i32_0, %c0_i32_1 : i32, i32, i32, i32
  }
  func.func @transform_1(%arg0: i32, %arg1: memref<16xf32, #tpu.memory_space<smem>>, %arg2: memref<4xf32, #tpu.memory_space<smem>>, %arg3: memref<100xf32, #tpu.memory_space<smem>>, %arg4: memref<4xf32, #tpu.memory_space<smem>>) -> (i32, i32, i32, i32) {
    %c0_i32 = arith.constant 0 : i32
    %c0_i32_0 = arith.constant 0 : i32
    %c0_i32_1 = arith.constant 0 : i32
    %c0_i32_2 = arith.constant 0 : i32
    return %arg0, %c0_i32, %c0_i32_0, %c0_i32_1 : i32, i32, i32, i32
  }
}

</mosaic_0001>

<llo_original>
// kernel: tpu_custom_call.1
$region0: #{tpu_custom_call.1}
  #allocation0 [shape = 'u32[]', space=smem, size = 0x4, offset = 0x4, fixed_abs, tag = 'smem constant byte address 0x4 - core index']
  #allocation1 [shape = 'u32[144,128]{1,0:T(1,128)}', space=vmem, size = 0x12000, scoped, tag = 'internal scratch']
  #allocation2 [shape = 'f32[4,20,20]{2,1,0:T(8,128)}', space=vmem, size = 0xc000, scoped, tag = 'scratch operand']
  #allocation3 [shape = 's32[1]{0}', space=sflag, size = 0x4, scoped, tag = 'scoped memory for tpu_custom_call.1']
  #allocation4 [shape = 'u8[512]{0}', space=smem, size = 0x200, scoped, tag = 'prefetched SMEM operand 0']
  #allocation5 [shape = 'u8[512]{0}', space=smem, size = 0x200, scoped, tag = 'prefetched SMEM operand 1']
  #allocation6 [shape = 'u8[512]{0}', space=smem, size = 0x200, scoped, tag = 'prefetched SMEM operand 2']
  #allocation7 [shape = 'u8[512]{0}', space=smem, size = 0x200, scoped, tag = 'prefetched SMEM operand 3']
  %s0 = inlined_call_operand.hbm [shape: f32[16], index: 0, kind: input, shape index: {}]
  %s1 = inlined_call_operand.vmem [shape: f32[4], index: 1, kind: input, shape index: {}]
  %s2 = inlined_call_operand.vmem [shape: f32[100], index: 2, kind: input, shape index: {}]
  %s3 = inlined_call_operand.vmem [shape: f32[4], index: 3, kind: input, shape index: {}]
  %s4 = inlined_call_operand.hbm [shape: f32[2,4,16,16], index: 4, kind: input, shape index: {}]
  %s5 = inlined_call_operand.hbm [shape: f32[2,8,16,16], index: 5, kind: output, shape index: {}]
  %s6 = sld [smem:[#allocation0]]
  $region41: #{tpu_custom_call.1} parent=0
    _
  %s8 = ssub.s32 1, %s6
  %s9 = scalar_select 0, %s8, %s6
  %11 = dma.hbm_to_smem %s0, 16, [#allocation4], [#allocation3]
  %s12 = sshll.u32 %s1, 4
  %s13 = int_to_ptr.vmem [resolvable:$true] %s12
  %15 = dma.vmem_to_smem %s13, 16, [#allocation5], [#allocation3]
  %s16 = sshll.u32 %s2, 4
  %s17 = int_to_ptr.vmem [resolvable:$true] %s16
  %19 = dma.vmem_to_smem %s17, 16, [#allocation6], [#allocation3]
  %s20 = sshll.u32 %s3, 4
  %s21 = int_to_ptr.vmem [resolvable:$true] %s20
  %23 = dma.vmem_to_smem %s21, 16, [#allocation7], [#allocation3]
  %24 = dma.done [#allocation3], 64
  %25 = sfence
  $region1: #{tpu_custom_call.1} parent=0
    #allocation8 [shape = 'u8[65536]{0}', space=vmem, size = 0x10000, scoped, tag = 'input window, operand 4']
    #allocation9 [shape = 's32[2]{0}', space=sflag, size = 0x8, scoped, tag = 'scoped memory for tpu_custom_call.1']
    #allocation10 [shape = 's32[2]{0}', space=sflag, size = 0x8, scoped, tag = 'scoped memory for tpu_custom_call.1']
    #allocation11 [shape = 'u8[131072]{0}', space=vmem, size = 0x20000, scoped, tag = 'output window, operand 0']
    %26 = vsyncpa [#allocation9], 0
    %s27 = scalar_lea.sflag [#allocation9], 1
    %28 = vsyncpa %s27, 0
    %29 = vsyncpa [#allocation10], 0
    %s30 = scalar_lea.sflag [#allocation10], 1
    %31 = vsyncpa %s30, 0
    loop: start=0, step=1, limit=4
    $region2: #{tpu_custom_call.1} parent=1 // loop_pre_header
      _
    $region3: #{tpu_custom_call.1} parent=1 // loop_header
      %s33 = sphi 0, %s37
      %p34 = scmp.ge.s32.totalorder %s33, 4
      %s43 = sphi 0, %s45
      %s46 = sphi 0, %s43
      %s47 = sphi 0, %s46
      %s63 = sphi 0, %s47
      %s69 = sphi 0, %s71
      %s72 = sphi 0, %s69
      %s73 = sphi 0, %s72
      %s89 = sphi 0, %s73
    $region4: #{tpu_custom_call.1} parent=1 // loop_header_branch
      %36 = sbr.rel (%p34) target = $region8
    $region5: #{tpu_custom_call.1} parent=1 // loop_body
      %s38 = ssub.s32 %s33, 1
      %s39 = ssub.s32 %s33, 2
      %s40 = sadd.s32 %s33, 1
      %s41 = ssub.s32 %s33, %s40
      %p42 = scmp.eq.s32.totalorder %s41, 0
      %s44 = sadd.s32 %s43, 1
      %s45 = scalar_select %p42, %s43, %s44
      %p48 = pneg %p42
      %p49 = scmp.eq.s32.totalorder %s33, 1
      %p50 = por %p48, %p49
      %p51 = scmp.ne.s32.totalorder %s43, %s46
      %p52 = scmp.eq.s32.totalorder %s33, 0
      %p53 = por %p51, %p52
      %p54 = scmp.ne.s32.totalorder %s43, %s46
      %p55 = scmp.eq.s32.totalorder %s38, 1
      %p56 = por %p54, %p55
      %p57 = scmp.ne.s32.totalorder %s46, %s47
      %p58 = scmp.eq.s32.totalorder %s38, 0
      %p59 = por %p57, %p58
      %p60 = scmp.ne.s32.totalorder %s46, %s47
      %p61 = scmp.eq.s32.totalorder %s39, 1
      %p62 = por %p60, %p61
      %p64 = scmp.ne.s32.totalorder %s47, %s63
      %p65 = scmp.eq.s32.totalorder %s39, 0
      %p66 = por %p64, %p65
      %s67 = ssub.s32 %s33, %s40
      %p68 = scmp.eq.s32.totalorder %s67, 0
      %s70 = sadd.s32 %s69, 1
      %s71 = scalar_select %p68, %s69, %s70
      %p74 = pneg %p68
      %p75 = scmp.eq.s32.totalorder %s33, 1
      %p76 = por %p74, %p75
      %p77 = scmp.ne.s32.totalorder %s69, %s72
      %p78 = scmp.eq.s32.totalorder %s33, 0
      %p79 = por %p77, %p78
      %p80 = scmp.ne.s32.totalorder %s69, %s72
      %p81 = scmp.eq.s32.totalorder %s38, 1
      %p82 = por %p80, %p81
      %p83 = scmp.ne.s32.totalorder %s72, %s73
      %p84 = scmp.eq.s32.totalorder %s38, 0
      %p85 = por %p83, %p84
      %p86 = scmp.ne.s32.totalorder %s72, %s73
      %p87 = scmp.eq.s32.totalorder %s39, 1
      %p88 = por %p86, %p87
      %p90 = scmp.ne.s32.totalorder %s73, %s89
      %p91 = scmp.eq.s32.totalorder %s39, 0
      %p92 = por %p90, %p91
      %p93 = scmp.le.s32.totalorder 1, %s33
      %p94 = scmp.lt.s32.totalorder %s33, 3
      %p95 = pnand %p93, %p94
      %p96 = pneg %p95
      // Predicated region
      $region9: #{tpu_custom_call.1} parent=5 // pred_check
        _
      $region10: #{tpu_custom_call.1} parent=5 // pred_check_branch
        %98 = sbr.rel (%p95) target = $region12
      $region11: #{tpu_custom_call.1} parent=5 // pred_region
        %s99 = ssub.s32 %s33, 1
      $region12: #{tpu_custom_call.1} parent=5 // pred_fallthru
        _
      %p100 = scmp.lt.s32.totalorder %s33, 2
      // Predicated region
      $region13: #{tpu_custom_call.1} parent=5 // pred_check
        %p101 = pneg %p100
      $region14: #{tpu_custom_call.1} parent=5 // pred_check_branch
        %103 = sbr.rel (%p101) target = $region16
      $region15: #{tpu_custom_call.1} parent=5 // pred_region
        // Predicated region
        $region17: #{tpu_custom_call.1} parent=15 // pred_check
          %p104 = pneg %p53
        $region18: #{tpu_custom_call.1} parent=15 // pred_check_branch
          %106 = sbr.rel (%p104) target = $region20
        $region19: #{tpu_custom_call.1} parent=15 // pred_region
          %s107 = sand.u32 %s43, 1
          %s108 = scalar_lea.sflag [#allocation9], %s107
          %s109 = sand.u32 %s43, 1
          %s110 = smul.addr %s109, 64
          %s111 = scalar_lea.vmem [#allocation8], %s110
          %s113 = ssub.s32 1024, 1024
          %114 = vsyncadd %s108, %s113
          %s115 = smul.addr %s33, 8
          %s116 = smul.addr %s115, 128
          %s117 = scalar_lea.hbm %s4, %s116
          %s118 = sshll.u32 %s111, 4
          %s119 = int_to_ptr.vmem [resolvable:$true] %s118
          %124 = dma.hbm_to_vmem [thread:$0]  %s117, 1024, %s119, %s108, 128, 128, 8
        $region20: #{tpu_custom_call.1} parent=15 // pred_fallthru
          _
      $region16: #{tpu_custom_call.1} parent=5 // pred_fallthru
        _
      %p125 = scmp.le.s32.totalorder 1, %s33
      %p126 = scmp.lt.s32.totalorder %s33, 3
      %p127 = pnand %p125, %p126
      %p128 = pneg %p127
      // Predicated region
      $region21: #{tpu_custom_call.1} parent=5 // pred_check
        _
      $region22: #{tpu_custom_call.1} parent=5 // pred_check_branch
        %130 = sbr.rel (%p127) target = $region24
      $region23: #{tpu_custom_call.1} parent=5 // pred_region
        %s131 = ssub.s32 %s33, 1
        %s132 = sand.u32 %s46, 1
        %s133 = scalar_lea.sflag [#allocation9], %s132
        %s134 = sand.u32 %s46, 1
        %s135 = smul.addr %s134, 64
        %s136 = scalar_lea.vmem [#allocation8], %s135
        // Predicated region
        $region25: #{tpu_custom_call.1} parent=23 // pred_check
          %p137 = pneg %p59
        $region26: #{tpu_custom_call.1} parent=23 // pred_check_branch
          %139 = sbr.rel (%p137) target = $region28
        $region27: #{tpu_custom_call.1} parent=23 // pred_region
          %140 = dma.done %s133, 1024
        $region28: #{tpu_custom_call.1} parent=23 // pred_fallthru
          _
        %s141 = sand.u32 %s46, 1
        %s142 = scalar_lea.sflag [#allocation9], %s141
        %s143 = sand.u32 %s46, 1
        %s144 = smul.addr %s143, 64
        %s145 = scalar_lea.vmem [#allocation8], %s144
        %p146 = pneg %p59
        %p147 = pneg %p56
        %p148 = pneg %p85
        %p149 = pneg %p82
        %s150 = sand.u32 %s72, 1
        %s151 = scalar_lea.sflag [#allocation10], %s150
        %s152 = sand.u32 %s72, 1
        %s153 = smul.addr %s152, 128
        %s154 = scalar_lea.vmem [#allocation11], %s153
        %v155 = vld [vmem:[%s136] sm:$0xff]
        %v156 = vld [vmem:[%s136 + $0x8] sm:$0xff]
        %v157 = vld [vmem:[%s136 + $0x10] sm:$0xff]
        %v158 = vld [vmem:[%s136 + $0x18] sm:$0xff]
        %v159 = vld [vmem:[%s136 + $0x20] sm:$0xff]
        %v160 = vld [vmem:[%s136 + $0x28] sm:$0xff]
        %v161 = vld [vmem:[%s136 + $0x30] sm:$0xff]
        %v162 = vld [vmem:[%s136 + $0x38] sm:$0xff]
        %vm163 = vcmask 162816
        %164 = vst.msk [vmem:[#allocation2] sm:$0xff] %vm163, 0.0
        %165 = vst.msk [vmem:[#allocation2 + $0x8] sm:$0xff] %vm163, 0.0
        %vm166 = vcmask 158720
        %167 = vst.msk [vmem:[#allocation2 + $0x10] sm:$0xf] %vm166, 0.0
        %168 = vst.msk [vmem:[#allocation2 + $0x18] sm:$0xff] %vm163, 0.0
        %169 = vst.msk [vmem:[#allocation2 + $0x20] sm:$0xff] %vm163, 0.0
        %170 = vst.msk [vmem:[#allocation2 + $0x28] sm:$0xf] %vm166, 0.0
        %171 = vst.msk [vmem:[#allocation2 + $0x30] sm:$0xff] %vm163, 0.0
        %172 = vst.msk [vmem:[#allocation2 + $0x38] sm:$0xff] %vm163, 0.0
        %173 = vst.msk [vmem:[#allocation2 + $0x40] sm:$0xf] %vm166, 0.0
        %174 = vst.msk [vmem:[#allocation2 + $0x48] sm:$0xff] %vm163, 0.0
        %175 = vst.msk [vmem:[#allocation2 + $0x50] sm:$0xff] %vm163, 0.0
        %176 = vst.msk [vmem:[#allocation2 + $0x58] sm:$0xf] %vm166, 0.0
        %s177 = sld [smem:[#allocation4]]
        %v178 = vstv %s177
        %v179 = vmul.f32 %v155, %v178
        %v180 = vmul.f32 %v156, %v178
        %v181 = vadd.f32 %v179, 0.0
        %v182 = vadd.f32 %v180, 0.0
        %s183 = sld [smem:[#allocation4 + $0x4]]
        %v184 = vstv %s183
        %v185 = vmul.f32 %v157, %v184
        %v186 = vmul.f32 %v158, %v184
        %v187 = vadd.f32 %v181, %v185
        %v188 = vadd.f32 %v182, %v186
        %s189 = sld [smem:[#allocation4 + $0x8]]
        %v190 = vstv %s189
        %v191 = vmul.f32 %v159, %v190
        %v192 = vmul.f32 %v160, %v190
        %v193 = vadd.f32 %v187, %v191
        %v194 = vadd.f32 %v188, %v192
        %s195 = sld [smem:[#allocation4 + $0xc]]
        %v196 = vstv %s195
        %v197 = vmul.f32 %v161, %v196
        %v198 = vmul.f32 %v162, %v196
        %v199 = vadd.f32 %v193, %v197
        %v200 = vadd.f32 %v194, %v198
        %s201 = sld [smem:[#allocation5]]
        %v202 = vstv %s201
        %v203 = vadd.f32 %v199, %v202
        %v204 = vadd.f32 %v200, %v202
        %v205 = vxor.u32 %v203, 2147483648
        %v206 = vxor.u32 %v204, 2147483648
        %v207 = vmul.f32 %v205, 1.442695
        %v208 = vpow.pop %v207
        %v209 = vmul.f32 %v206, 1.442695
        %v210 = vpow.pop %v209
        %v211 = vadd.f32 %v208, 1.0
        %v212 = vadd.f32 %v210, 1.0
        %v213 = vrcp.pop %v211
        %v214 = vmul.f32 1.0, %v213
        %v215 = vrcp.pop %v212
        %v216 = vmul.f32 1.0, %v215
        %v217 = vmul.f32 %v203, %v214
        %v218 = vmul.f32 %v204, %v216
        %vm219 = vcmask 130048
        %220 = vst.msk [vmem:[%s154] sm:$0xff] %vm219, %v217
        %221 = vst.msk [vmem:[%s154 + $0x8] sm:$0xff] %vm219, %v218
        %224 = vrot.lane.b32.xlu0 %v217, 2
        %v225 = vpop.permute.xlu0 %224
        %226 = vrot.lane.b32.xlu0 %v218, 2
        %v227 = vpop.permute.xlu0 %226
        %vm230 = vcmask 146448
        %231 = vst.msk [vmem:[#allocation2 + $0x2] sm:$0xff] %vm230, %v225
        %232 = vst.msk [vmem:[#allocation2 + $0xa] sm:$0xff] %vm230, %v227
        %s233 = sld [smem:[#allocation4 + $0x1]]
        %v234 = vstv %s233
        %v235 = vmul.f32 %v155, %v234
        %v236 = vmul.f32 %v156, %v234
        %v237 = vadd.f32 %v235, 0.0
        %v238 = vadd.f32 %v236, 0.0
        %s239 = sld [smem:[#allocation4 + $0x5]]
        %v240 = vstv %s239
        %v241 = vmul.f32 %v157, %v240
        %v242 = vmul.f32 %v158, %v240
        %v243 = vadd.f32 %v237, %v241
        %v244 = vadd.f32 %v238, %v242
        %s245 = sld [smem:[#allocation4 + $0x9]]
        %v246 = vstv %s245
        %v247 = vmul.f32 %v159, %v246
        %v248 = vmul.f32 %v160, %v246
        %v249 = vadd.f32 %v243, %v247
        %v250 = vadd.f32 %v244, %v248
        %s251 = sld [smem:[#allocation4 + $0xd]]
        %v252 = vstv %s251
        %v253 = vmul.f32 %v161, %v252
        %v254 = vmul.f32 %v162, %v252
        %v255 = vadd.f32 %v249, %v253
        %v256 = vadd.f32 %v250, %v254
        %s257 = sld [smem:[#allocation5 + $0x1]]
        %v258 = vstv %s257
        %v259 = vadd.f32 %v255, %v258
        %v260 = vadd.f32 %v256, %v258
        %v261 = vxor.u32 %v259, 2147483648
        %v262 = vxor.u32 %v260, 2147483648
        %v263 = vmul.f32 %v261, 1.442695
        %v264 = vpow.pop %v263
        %v265 = vmul.f32 %v262, 1.442695
        %v266 = vpow.pop %v265
        %v267 = vadd.f32 %v264, 1.0
        %v268 = vadd.f32 %v266, 1.0
        %v269 = vrcp.pop %v267
        %v270 = vmul.f32 1.0, %v269
        %v271 = vrcp.pop %v268
        %v272 = vmul.f32 1.0, %v271
        %v273 = vmul.f32 %v259, %v270
        %v274 = vmul.f32 %v260, %v272
        %s275 = scalar_lea.vmem %s154, 16 [#allocation11]
        %276 = vst.msk [vmem:[%s275] sm:$0xff] %vm219, %v273
        %277 = vst.msk [vmem:[%s275 + $0x8] sm:$0xff] %vm219, %v274
        %280 = vrot.lane.b32.xlu0 %v273, 2
        %v281 = vpop.permute.xlu0 %280
        %282 = vrot.lane.b32.xlu0 %v274, 2
        %v283 = vpop.permute.xlu0 %282
        %s286 = scalar_lea.vmem [#allocation2], 24
        %287 = vst.msk [vmem:[%s286 + $0x2] sm:$0xff] %vm230, %v281
        %288 = vst.msk [vmem:[%s286 + $0xa] sm:$0xff] %vm230, %v283
        %s289 = sld [smem:[#allocation4 + $0x2]]
        %v290 = vstv %s289
        %v291 = vmul.f32 %v155, %v290
        %v292 = vmul.f32 %v156, %v290
        %v293 = vadd.f32 %v291, 0.0
        %v294 = vadd.f32 %v292, 0.0
        %s295 = sld [smem:[#allocation4 + $0x6]]
        %v296 = vstv %s295
        %v297 = vmul.f32 %v157, %v296
        %v298 = vmul.f32 %v158, %v296
        %v299 = vadd.f32 %v293, %v297
        %v300 = vadd.f32 %v294, %v298
        %s301 = sld [smem:[#allocation4 + $0xa]]
        %v302 = vstv %s301
        %v303 = vmul.f32 %v159, %v302
        %v304 = vmul.f32 %v160, %v302
        %v305 = vadd.f32 %v299, %v303
        %v306 = vadd.f32 %v300, %v304
        %s307 = sld [smem:[#allocation4 + $0xe]]
        %v308 = vstv %s307
        %v309 = vmul.f32 %v161, %v308
        %v310 = vmul.f32 %v162, %v308
        %v311 = vadd.f32 %v305, %v309
        %v312 = vadd.f32 %v306, %v310
        %s313 = sld [smem:[#allocation5 + $0x2]]
        %v314 = vstv %s313
        %v315 = vadd.f32 %v311, %v314
        %v316 = vadd.f32 %v312, %v314
        %v317 = vxor.u32 %v315, 2147483648
        %v318 = vxor.u32 %v316, 2147483648
        %v319 = vmul.f32 %v317, 1.442695
        %v320 = vpow.pop %v319
        %v321 = vmul.f32 %v318, 1.442695
        %v322 = vpow.pop %v321
        %v323 = vadd.f32 %v320, 1.0
        %v324 = vadd.f32 %v322, 1.0
        %v325 = vrcp.pop %v323
        %v326 = vmul.f32 1.0, %v325
        %v327 = vrcp.pop %v324
        %v328 = vmul.f32 1.0, %v327
        %v329 = vmul.f32 %v315, %v326
        %v330 = vmul.f32 %v316, %v328
        %s331 = scalar_lea.vmem %s154, 32 [#allocation11]
        %332 = vst.msk [vmem:[%s331] sm:$0xff] %vm219, %v329
        %333 = vst.msk [vmem:[%s331 + $0x8] sm:$0xff] %vm219, %v330
        %336 = vrot.lane.b32.xlu0 %v329, 2
        %v337 = vpop.permute.xlu0 %336
        %338 = vrot.lane.b32.xlu0 %v330, 2
        %v339 = vpop.permute.xlu0 %338
        %s342 = scalar_lea.vmem [#allocation2], 48
        %343 = vst.msk [vmem:[%s342 + $0x2] sm:$0xff] %vm230, %v337
        %344 = vst.msk [vmem:[%s342 + $0xa] sm:$0xff] %vm230, %v339
        %s345 = sld [smem:[#allocation4 + $0x3]]
        %v346 = vstv %s345
        %v347 = vmul.f32 %v155, %v346
        %v348 = vmul.f32 %v156, %v346
        %v349 = vadd.f32 %v347, 0.0
        %v350 = vadd.f32 %v348, 0.0
        %s351 = sld [smem:[#allocation4 + $0x7]]
        %v352 = vstv %s351
        %v353 = vmul.f32 %v157, %v352
        %v354 = vmul.f32 %v158, %v352
        %v355 = vadd.f32 %v349, %v353
        %v356 = vadd.f32 %v350, %v354
        %s357 = sld [smem:[#allocation4 + $0xb]]
        %v358 = vstv %s357
        %v359 = vmul.f32 %v159, %v358
        %v360 = vmul.f32 %v160, %v358
        %v361 = vadd.f32 %v355, %v359
        %v362 = vadd.f32 %v356, %v360
        %s363 = sld [smem:[#allocation4 + $0xf]]
        %v364 = vstv %s363
        %v365 = vmul.f32 %v161, %v364
        %v366 = vmul.f32 %v162, %v364
        %v367 = vadd.f32 %v361, %v365
        %v368 = vadd.f32 %v362, %v366
        %s369 = sld [smem:[#allocation5 + $0x3]]
        %v370 = vstv %s369
        %v371 = vadd.f32 %v367, %v370
        %v372 = vadd.f32 %v368, %v370
        %v373 = vxor.u32 %v371, 2147483648
        %v374 = vxor.u32 %v372, 2147483648
        %v375 = vmul.f32 %v373, 1.442695
        %v376 = vpow.pop %v375
        %v377 = vmul.f32 %v374, 1.442695
        %v378 = vpow.pop %v377
        %v379 = vadd.f32 %v376, 1.0
        %v380 = vadd.f32 %v378, 1.0
        %v381 = vrcp.pop %v379
        %v382 = vmul.f32 1.0, %v381
        %v383 = vrcp.pop %v380
        %v384 = vmul.f32 1.0, %v383
        %v385 = vmul.f32 %v371, %v382
        %v386 = vmul.f32 %v372, %v384
        %s387 = scalar_lea.vmem %s154, 48 [#allocation11]
        %388 = vst.msk [vmem:[%s387] sm:$0xff] %vm219, %v385
        %389 = vst.msk [vmem:[%s387 + $0x8] sm:$0xff] %vm219, %v386
        %392 = vrot.lane.b32.xlu0 %v385, 2
        %v393 = vpop.permute.xlu0 %392
        %394 = vrot.lane.b32.xlu0 %v386, 2
        %v395 = vpop.permute.xlu0 %394
        %s398 = scalar_lea.vmem [#allocation2], 72
        %399 = vst.msk [vmem:[%s398 + $0x2] sm:$0xff] %vm230, %v393
        %400 = vst.msk [vmem:[%s398 + $0xa] sm:$0xff] %vm230, %v395
        %v401 = vld [vmem:[#allocation2] sm:$0xff]
        %v402 = vld [vmem:[#allocation2 + $0x8] sm:$0xff]
        %s403 = sld [smem:[#allocation6]]
        %v404 = vstv %s403
        %v405 = vmul.f32 %v401, %v404
        %v406 = vmul.f32 %v402, %v404
        %v407 = vadd.f32 %v405, 0.0
        %v408 = vadd.f32 %v406, 0.0
        %s409 = sld [smem:[#allocation6 + $0x1]]
        %v410 = vstv %s409
        %v411 = vmul.f32 %v401, %v410
        %v412 = vmul.f32 %v402, %v410
        %415 = vrot.lane.b32.xlu0 %v411, 127
        %v416 = vpop.permute.xlu0 %415
        %417 = vrot.lane.b32.xlu0 %v412, 127
        %v418 = vpop.permute.xlu0 %417
        %v421 = vadd.f32 %v407, %v416
        %v422 = vadd.f32 %v408, %v418
        %s423 = sld [smem:[#allocation6 + $0x2]]
        %v424 = vstv %s423
        %v425 = vmul.f32 %v401, %v424
        %v426 = vmul.f32 %v402, %v424
        %429 = vrot.lane.b32.xlu0 %v425, 126
        %v430 = vpop.permute.xlu0 %429
        %431 = vrot.lane.b32.xlu0 %v426, 126
        %v432 = vpop.permute.xlu0 %431
        %v435 = vadd.f32 %v421, %v430
        %v436 = vadd.f32 %v422, %v432
        %s437 = sld [smem:[#allocation6 + $0x3]]
        %v438 = vstv %s437
        %v439 = vmul.f32 %v401, %v438
        %v440 = vmul.f32 %v402, %v438
        %443 = vrot.lane.b32.xlu0 %v439, 125
        %v444 = vpop.permute.xlu0 %443
        %445 = vrot.lane.b32.xlu0 %v440, 125
        %v446 = vpop.permute.xlu0 %445
        %v449 = vadd.f32 %v435, %v444
        %v450 = vadd.f32 %v436, %v446
        %s451 = sld [smem:[#allocation6 + $0x4]]
        %v452 = vstv %s451
        %v453 = vmul.f32 %v401, %v452
        %v454 = vmul.f32 %v402, %v452
        %457 = vrot.lane.b32.xlu0 %v453, 124
        %v458 = vpop.permute.xlu0 %457
        %459 = vrot.lane.b32.xlu0 %v454, 124
        %v460 = vpop.permute.xlu0 %459
        %v463 = vadd.f32 %v449, %v458
        %v464 = vadd.f32 %v450, %v460
        %v465 = vld [vmem:[#allocation2 + $0x1] sm:$0xff]
        %v466 = vld [vmem:[#allocation2 + $0x9] sm:$0xff]
        %s467 = sld [smem:[#allocation6 + $0x5]]
        %v468 = vstv %s467
        %v469 = vmul.f32 %v465, %v468
        %v470 = vmul.f32 %v466, %v468
        %v471 = vadd.f32 %v463, %v469
        %v472 = vadd.f32 %v464, %v470
        %s473 = sld [smem:[#allocation6 + $0x6]]
        %v474 = vstv %s473
        %v475 = vmul.f32 %v465, %v474
        %v476 = vmul.f32 %v466, %v474
        %479 = vrot.lane.b32.xlu0 %v475, 127
        %v480 = vpop.permute.xlu0 %479
        %481 = vrot.lane.b32.xlu0 %v476, 127
        %v482 = vpop.permute.xlu0 %481
        %v485 = vadd.f32 %v471, %v480
        %v486 = vadd.f32 %v472, %v482
        %s487 = sld [smem:[#allocation6 + $0x7]]
        %v488 = vstv %s487
        %v489 = vmul.f32 %v465, %v488
        %v490 = vmul.f32 %v466, %v488
        %493 = vrot.lane.b32.xlu0 %v489, 126
        %v494 = vpop.permute.xlu0 %493
        %495 = vrot.lane.b32.xlu0 %v490, 126
        %v496 = vpop.permute.xlu0 %495
        %v499 = vadd.f32 %v485, %v494
        %v500 = vadd.f32 %v486, %v496
        %s501 = sld [smem:[#allocation6 + $0x8]]
        %v502 = vstv %s501
        %v503 = vmul.f32 %v465, %v502
        %v504 = vmul.f32 %v466, %v502
        %507 = vrot.lane.b32.xlu0 %v503, 125
        %v508 = vpop.permute.xlu0 %507
        %509 = vrot.lane.b32.xlu0 %v504, 125
        %v510 = vpop.permute.xlu0 %509
        %v513 = vadd.f32 %v499, %v508
        %v514 = vadd.f32 %v500, %v510
        %s515 = sld [smem:[#allocation6 + $0x9]]
        %v516 = vstv %s515
        %v517 = vmul.f32 %v465, %v516
        %v518 = vmul.f32 %v466, %v516
        %521 = vrot.lane.b32.xlu0 %v517, 124
        %v522 = vpop.permute.xlu0 %521
        %523 = vrot.lane.b32.xlu0 %v518, 124
        %v524 = vpop.permute.xlu0 %523
        %v527 = vadd.f32 %v513, %v522
        %v528 = vadd.f32 %v514, %v524
        %v529 = vld [vmem:[#allocation2 + $0x2] sm:$0xff]
        %v530 = vld [vmem:[#allocation2 + $0xa] sm:$0xff]
        %s531 = sld [smem:[#allocation6 + $0xa]]
        %v532 = vstv %s531
        %v533 = vmul.f32 %v529, %v532
        %v534 = vmul.f32 %v530, %v532
        %v535 = vadd.f32 %v527, %v533
        %v536 = vadd.f32 %v528, %v534
        %s537 = sld [smem:[#allocation6 + $0xb]]
        %v538 = vstv %s537
        %v539 = vmul.f32 %v529, %v538
        %v540 = vmul.f32 %v530, %v538
        %543 = vrot.lane.b32.xlu0 %v539, 127
        %v544 = vpop.permute.xlu0 %543
        %545 = vrot.lane.b32.xlu0 %v540, 127
        %v546 = vpop.permute.xlu0 %545
        %v549 = vadd.f32 %v535, %v544
        %v550 = vadd.f32 %v536, %v546
        %s551 = sld [smem:[#allocation6 + $0xc]]
        %v552 = vstv %s551
        %v553 = vmul.f32 %v529, %v552
        %v554 = vmul.f32 %v530, %v552
        %557 = vrot.lane.b32.xlu0 %v553, 126
        %v558 = vpop.permute.xlu0 %557
        %559 = vrot.lane.b32.xlu0 %v554, 126
        %v560 = vpop.permute.xlu0 %559
        %v563 = vadd.f32 %v549, %v558
        %v564 = vadd.f32 %v550, %v560
        %s565 = sld [smem:[#allocation6 + $0xd]]
        %v566 = vstv %s565
        %v567 = vmul.f32 %v529, %v566
        %v568 = vmul.f32 %v530, %v566
        %571 = vrot.lane.b32.xlu0 %v567, 125
        %v572 = vpop.permute.xlu0 %571
        %573 = vrot.lane.b32.xlu0 %v568, 125
        %v574 = vpop.permute.xlu0 %573
        %v577 = vadd.f32 %v563, %v572
        %v578 = vadd.f32 %v564, %v574
        %s579 = sld [smem:[#allocation6 + $0xe]]
        %v580 = vstv %s579
        %v581 = vmul.f32 %v529, %v580
        %v582 = vmul.f32 %v530, %v580
        %585 = vrot.lane.b32.xlu0 %v581, 124
        %v586 = vpop.permute.xlu0 %585
        %587 = vrot.lane.b32.xlu0 %v582, 124
        %v588 = vpop.permute.xlu0 %587
        %v591 = vadd.f32 %v577, %v586
        %v592 = vadd.f32 %v578, %v588
        %v593 = vld [vmem:[#allocation2 + $0x3] sm:$0xff]
        %v594 = vld [vmem:[#allocation2 + $0xb] sm:$0xff]
        %s595 = sld [smem:[#allocation6 + $0xf]]
        %v596 = vstv %s595
        %v597 = vmul.f32 %v593, %v596
        %v598 = vmul.f32 %v594, %v596
        %v599 = vadd.f32 %v591, %v597
        %v600 = vadd.f32 %v592, %v598
        %s601 = sld [smem:[#allocation6 + $0x10]]
        %v602 = vstv %s601
        %v603 = vmul.f32 %v593, %v602
        %v604 = vmul.f32 %v594, %v602
        %607 = vrot.lane.b32.xlu0 %v603, 127
        %v608 = vpop.permute.xlu0 %607
        %609 = vrot.lane.b32.xlu0 %v604, 127
        %v610 = vpop.permute.xlu0 %609
        %v613 = vadd.f32 %v599, %v608
        %v614 = vadd.f32 %v600, %v610
        %s615 = sld [smem:[#allocation6 + $0x11]]
        %v616 = vstv %s615
        %v617 = vmul.f32 %v593, %v616
        %v618 = vmul.f32 %v594, %v616
        %621 = vrot.lane.b32.xlu0 %v617, 126
        %v622 = vpop.permute.xlu0 %621
        %623 = vrot.lane.b32.xlu0 %v618, 126
        %v624 = vpop.permute.xlu0 %623
        %v627 = vadd.f32 %v613, %v622
        %v628 = vadd.f32 %v614, %v624
        %s629 = sld [smem:[#allocation6 + $0x12]]
        %v630 = vstv %s629
        %v631 = vmul.f32 %v593, %v630
        %v632 = vmul.f32 %v594, %v630
        %635 = vrot.lane.b32.xlu0 %v631, 125
        %v636 = vpop.permute.xlu0 %635
        %637 = vrot.lane.b32.xlu0 %v632, 125
        %v638 = vpop.permute.xlu0 %637
        %v641 = vadd.f32 %v627, %v636
        %v642 = vadd.f32 %v628, %v638
        %s643 = sld [smem:[#allocation6 + $0x13]]
        %v644 = vstv %s643
        %v645 = vmul.f32 %v593, %v644
        %v646 = vmul.f32 %v594, %v644
        %649 = vrot.lane.b32.xlu0 %v645, 124
        %v650 = vpop.permute.xlu0 %649
        %651 = vrot.lane.b32.xlu0 %v646, 124
        %v652 = vpop.permute.xlu0 %651
        %v655 = vadd.f32 %v641, %v650
        %v656 = vadd.f32 %v642, %v652
        %v657 = vld [vmem:[#allocation2 + $0x4] sm:$0xff]
        %v658 = vld [vmem:[#allocation2 + $0xc] sm:$0xff]
        %s659 = sld [smem:[#allocation6 + $0x14]]
        %v660 = vstv %s659
        %v661 = vmul.f32 %v657, %v660
        %v662 = vmul.f32 %v658, %v660
        %v663 = vadd.f32 %v655, %v661
        %v664 = vadd.f32 %v656, %v662
        %s665 = sld [smem:[#allocation6 + $0x15]]
        %v666 = vstv %s665
        %v667 = vmul.f32 %v657, %v666
        %v668 = vmul.f32 %v658, %v666
        %671 = vrot.lane.b32.xlu0 %v667, 127
        %v672 = vpop.permute.xlu0 %671
        %673 = vrot.lane.b32.xlu0 %v668, 127
        %v674 = vpop.permute.xlu0 %673
        %v677 = vadd.f32 %v663, %v672
        %v678 = vadd.f32 %v664, %v674
        %s679 = sld [smem:[#allocation6 + $0x16]]
        %v680 = vstv %s679
        %v681 = vmul.f32 %v657, %v680
        %v682 = vmul.f32 %v658, %v680
        %685 = vrot.lane.b32.xlu0 %v681, 126
        %v686 = vpop.permute.xlu0 %685
        %687 = vrot.lane.b32.xlu0 %v682, 126
        %v688 = vpop.permute.xlu0 %687
        %v691 = vadd.f32 %v677, %v686
        %v692 = vadd.f32 %v678, %v688
        %s693 = sld [smem:[#allocation6 + $0x17]]
        %v694 = vstv %s693
        %v695 = vmul.f32 %v657, %v694
        %v696 = vmul.f32 %v658, %v694
        %699 = vrot.lane.b32.xlu0 %v695, 125
        %v700 = vpop.permute.xlu0 %699
        %701 = vrot.lane.b32.xlu0 %v696, 125
        %v702 = vpop.permute.xlu0 %701
        %v705 = vadd.f32 %v691, %v700
        %v706 = vadd.f32 %v692, %v702
        %s707 = sld [smem:[#allocation6 + $0x18]]
        %v708 = vstv %s707
        %v709 = vmul.f32 %v657, %v708
        %v710 = vmul.f32 %v658, %v708
        %713 = vrot.lane.b32.xlu0 %v709, 124
        %v714 = vpop.permute.xlu0 %713
        %715 = vrot.lane.b32.xlu0 %v710, 124
        %v716 = vpop.permute.xlu0 %715
        %v719 = vadd.f32 %v705, %v714
        %v720 = vadd.f32 %v706, %v716
        %s721 = sld [smem:[#allocation7]]
        %v722 = vstv %s721
        %v723 = vadd.f32 %v719, %v722
        %v724 = vadd.f32 %v720, %v722
        %v725 = vxor.u32 %v723, 2147483648
        %v726 = vxor.u32 %v724, 2147483648
        %v727 = vmul.f32 %v725, 1.442695
        %v728 = vpow.pop %v727
        %v729 = vmul.f32 %v726, 1.442695
        %v730 = vpow.pop %v729
        %v731 = vadd.f32 %v728, 1.0
        %v732 = vadd.f32 %v730, 1.0
        %v733 = vrcp.pop %v731
        %v734 = vmul.f32 1.0, %v733
        %v735 = vrcp.pop %v732
        %v736 = vmul.f32 1.0, %v735
        %v737 = vmul.f32 %v723, %v734
        %v738 = vmul.f32 %v724, %v736
        %s739 = scalar_lea.vmem %s154, 64 [#allocation11]
        %740 = vst.msk [vmem:[%s739] sm:$0xff] %vm219, %v737
        %741 = vst.msk [vmem:[%s739 + $0x8] sm:$0xff] %vm219, %v738
        %v742 = vld [vmem:[%s286] sm:$0xff]
        %v743 = vld [vmem:[%s286 + $0x8] sm:$0xff]
        %s744 = sld [smem:[#allocation6 + $0x19]]
        %v745 = vstv %s744
        %v746 = vmul.f32 %v742, %v745
        %v747 = vmul.f32 %v743, %v745
        %v748 = vadd.f32 %v746, 0.0
        %v749 = vadd.f32 %v747, 0.0
        %s750 = sld [smem:[#allocation6 + $0x1a]]
        %v751 = vstv %s750
        %v752 = vmul.f32 %v742, %v751
        %v753 = vmul.f32 %v743, %v751
        %756 = vrot.lane.b32.xlu0 %v752, 127
        %v757 = vpop.permute.xlu0 %756
        %758 = vrot.lane.b32.xlu0 %v753, 127
        %v759 = vpop.permute.xlu0 %758
        %v762 = vadd.f32 %v748, %v757
        %v763 = vadd.f32 %v749, %v759
        %s764 = sld [smem:[#allocation6 + $0x1b]]
        %v765 = vstv %s764
        %v766 = vmul.f32 %v742, %v765
        %v767 = vmul.f32 %v743, %v765
        %770 = vrot.lane.b32.xlu0 %v766, 126
        %v771 = vpop.permute.xlu0 %770
        %772 = vrot.lane.b32.xlu0 %v767, 126
        %v773 = vpop.permute.xlu0 %772
        %v776 = vadd.f32 %v762, %v771
        %v777 = vadd.f32 %v763, %v773
        %s778 = sld [smem:[#allocation6 + $0x1c]]
        %v779 = vstv %s778
        %v780 = vmul.f32 %v742, %v779
        %v781 = vmul.f32 %v743, %v779
        %784 = vrot.lane.b32.xlu0 %v780, 125
        %v785 = vpop.permute.xlu0 %784
        %786 = vrot.lane.b32.xlu0 %v781, 125
        %v787 = vpop.permute.xlu0 %786
        %v790 = vadd.f32 %v776, %v785
        %v791 = vadd.f32 %v777, %v787
        %s792 = sld [smem:[#allocation6 + $0x1d]]
        %v793 = vstv %s792
        %v794 = vmul.f32 %v742, %v793
        %v795 = vmul.f32 %v743, %v793
        %798 = vrot.lane.b32.xlu0 %v794, 124
        %v799 = vpop.permute.xlu0 %798
        %800 = vrot.lane.b32.xlu0 %v795, 124
        %v801 = vpop.permute.xlu0 %800
        %v804 = vadd.f32 %v790, %v799
        %v805 = vadd.f32 %v791, %v801
        %v806 = vld [vmem:[%s286 + $0x1] sm:$0xff]
        %v807 = vld [vmem:[%s286 + $0x9] sm:$0xff]
        %s808 = sld [smem:[#allocation6 + $0x1e]]
        %v809 = vstv %s808
        %v810 = vmul.f32 %v806, %v809
        %v811 = vmul.f32 %v807, %v809
        %v812 = vadd.f32 %v804, %v810
        %v813 = vadd.f32 %v805, %v811
        %s814 = sld [smem:[#allocation6 + $0x1f]]
        %v815 = vstv %s814
        %v816 = vmul.f32 %v806, %v815
        %v817 = vmul.f32 %v807, %v815
        %820 = vrot.lane.b32.xlu0 %v816, 127
        %v821 = vpop.permute.xlu0 %820
        %822 = vrot.lane.b32.xlu0 %v817, 127
        %v823 = vpop.permute.xlu0 %822
        %v826 = vadd.f32 %v812, %v821
        %v827 = vadd.f32 %v813, %v823
        %s828 = sld [smem:[#allocation6 + $0x20]]
        %v829 = vstv %s828
        %v830 = vmul.f32 %v806, %v829
        %v831 = vmul.f32 %v807, %v829
        %834 = vrot.lane.b32.xlu0 %v830, 126
        %v835 = vpop.permute.xlu0 %834
        %836 = vrot.lane.b32.xlu0 %v831, 126
        %v837 = vpop.permute.xlu0 %836
        %v840 = vadd.f32 %v826, %v835
        %v841 = vadd.f32 %v827, %v837
        %s842 = sld [smem:[#allocation6 + $0x21]]
        %v843 = vstv %s842
        %v844 = vmul.f32 %v806, %v843
        %v845 = vmul.f32 %v807, %v843
        %848 = vrot.lane.b32.xlu0 %v844, 125
        %v849 = vpop.permute.xlu0 %848
        %850 = vrot.lane.b32.xlu0 %v845, 125
        %v851 = vpop.permute.xlu0 %850
        %v854 = vadd.f32 %v840, %v849
        %v855 = vadd.f32 %v841, %v851
        %s856 = sld [smem:[#allocation6 + $0x22]]
        %v857 = vstv %s856
        %v858 = vmul.f32 %v806, %v857
        %v859 = vmul.f32 %v807, %v857
        %862 = vrot.lane.b32.xlu0 %v858, 124
        %v863 = vpop.permute.xlu0 %862
        %864 = vrot.lane.b32.xlu0 %v859, 124
        %v865 = vpop.permute.xlu0 %864
        %v868 = vadd.f32 %v854, %v863
        %v869 = vadd.f32 %v855, %v865
        %v870 = vld [vmem:[%s286 + $0x2] sm:$0xff]
        %v871 = vld [vmem:[%s286 + $0xa] sm:$0xff]
        %s872 = sld [smem:[#allocation6 + $0x23]]
        %v873 = vstv %s872
        %v874 = vmul.f32 %v870, %v873
        %v875 = vmul.f32 %v871, %v873
        %v876 = vadd.f32 %v868, %v874
        %v877 = vadd.f32 %v869, %v875
        %s878 = sld [smem:[#allocation6 + $0x24]]
        %v879 = vstv %s878
        %v880 = vmul.f32 %v870, %v879
        %v881 = vmul.f32 %v871, %v879
        %884 = vrot.lane.b32.xlu0 %v880, 127
        %v885 = vpop.permute.xlu0 %884
        %886 = vrot.lane.b32.xlu0 %v881, 127
        %v887 = vpop.permute.xlu0 %886
        %v890 = vadd.f32 %v876, %v885
        %v891 = vadd.f32 %v877, %v887
        %s892 = sld [smem:[#allocation6 + $0x25]]
        %v893 = vstv %s892
        %v894 = vmul.f32 %v870, %v893
        %v895 = vmul.f32 %v871, %v893
        %898 = vrot.lane.b32.xlu0 %v894, 126
        %v899 = vpop.permute.xlu0 %898
        %900 = vrot.lane.b32.xlu0 %v895, 126
        %v901 = vpop.permute.xlu0 %900
        %v904 = vadd.f32 %v890, %v899
        %v905 = vadd.f32 %v891, %v901
        %s906 = sld [smem:[#allocation6 + $0x26]]
        %v907 = vstv %s906
        %v908 = vmul.f32 %v870, %v907
        %v909 = vmul.f32 %v871, %v907
        %912 = vrot.lane.b32.xlu0 %v908, 125
        %v913 = vpop.permute.xlu0 %912
        %914 = vrot.lane.b32.xlu0 %v909, 125
        %v915 = vpop.permute.xlu0 %914
        %v918 = vadd.f32 %v904, %v913
        %v919 = vadd.f32 %v905, %v915
        %s920 = sld [smem:[#allocation6 + $0x27]]
        %v921 = vstv %s920
        %v922 = vmul.f32 %v870, %v921
        %v923 = vmul.f32 %v871, %v921
        %926 = vrot.lane.b32.xlu0 %v922, 124
        %v927 = vpop.permute.xlu0 %926
        %928 = vrot.lane.b32.xlu0 %v923, 124
        %v929 = vpop.permute.xlu0 %928
        %v932 = vadd.f32 %v918, %v927
        %v933 = vadd.f32 %v919, %v929
        %v934 = vld [vmem:[%s286 + $0x3] sm:$0xff]
        %v935 = vld [vmem:[%s286 + $0xb] sm:$0xff]
        %s936 = sld [smem:[#allocation6 + $0x28]]
        %v937 = vstv %s936
        %v938 = vmul.f32 %v934, %v937
        %v939 = vmul.f32 %v935, %v937
        %v940 = vadd.f32 %v932, %v938
        %v941 = vadd.f32 %v933, %v939
        %s942 = sld [smem:[#allocation6 + $0x29]]
        %v943 = vstv %s942
        %v944 = vmul.f32 %v934, %v943
        %v945 = vmul.f32 %v935, %v943
        %948 = vrot.lane.b32.xlu0 %v944, 127
        %v949 = vpop.permute.xlu0 %948
        %950 = vrot.lane.b32.xlu0 %v945, 127
        %v951 = vpop.permute.xlu0 %950
        %v954 = vadd.f32 %v940, %v949
        %v955 = vadd.f32 %v941, %v951
        %s956 = sld [smem:[#allocation6 + $0x2a]]
        %v957 = vstv %s956
        %v958 = vmul.f32 %v934, %v957
        %v959 = vmul.f32 %v935, %v957
        %962 = vrot.lane.b32.xlu0 %v958, 126
        %v963 = vpop.permute.xlu0 %962
        %964 = vrot.lane.b32.xlu0 %v959, 126
        %v965 = vpop.permute.xlu0 %964
        %v968 = vadd.f32 %v954, %v963
        %v969 = vadd.f32 %v955, %v965
        %s970 = sld [smem:[#allocation6 + $0x2b]]
        %v971 = vstv %s970
        %v972 = vmul.f32 %v934, %v971
        %v973 = vmul.f32 %v935, %v971
        %976 = vrot.lane.b32.xlu0 %v972, 125
        %v977 = vpop.permute.xlu0 %976
        %978 = vrot.lane.b32.xlu0 %v973, 125
        %v979 = vpop.permute.xlu0 %978
        %v982 = vadd.f32 %v968, %v977
        %v983 = vadd.f32 %v969, %v979
        %s984 = sld [smem:[#allocation6 + $0x2c]]
        %v985 = vstv %s984
        %v986 = vmul.f32 %v934, %v985
        %v987 = vmul.f32 %v935, %v985
        %990 = vrot.lane.b32.xlu0 %v986, 124
        %v991 = vpop.permute.xlu0 %990
        %992 = vrot.lane.b32.xlu0 %v987, 124
        %v993 = vpop.permute.xlu0 %992
        %v996 = vadd.f32 %v982, %v991
        %v997 = vadd.f32 %v983, %v993
        %v998 = vld [vmem:[%s286 + $0x4] sm:$0xff]
        %v999 = vld [vmem:[%s286 + $0xc] sm:$0xff]
        %s1000 = sld [smem:[#allocation6 + $0x2d]]
        %v1001 = vstv %s1000
        %v1002 = vmul.f32 %v998, %v1001
        %v1003 = vmul.f32 %v999, %v1001
        %v1004 = vadd.f32 %v996, %v1002
        %v1005 = vadd.f32 %v997, %v1003
        %s1006 = sld [smem:[#allocation6 + $0x2e]]
        %v1007 = vstv %s1006
        %v1008 = vmul.f32 %v998, %v1007
        %v1009 = vmul.f32 %v999, %v1007
        %1012 = vrot.lane.b32.xlu0 %v1008, 127
        %v1013 = vpop.permute.xlu0 %1012
        %1014 = vrot.lane.b32.xlu0 %v1009, 127
        %v1015 = vpop.permute.xlu0 %1014
        %v1018 = vadd.f32 %v1004, %v1013
        %v1019 = vadd.f32 %v1005, %v1015
        %s1020 = sld [smem:[#allocation6 + $0x2f]]
        %v1021 = vstv %s1020
        %v1022 = vmul.f32 %v998, %v1021
        %v1023 = vmul.f32 %v999, %v1021
        %1026 = vrot.lane.b32.xlu0 %v1022, 126
        %v1027 = vpop.permute.xlu0 %1026
        %1028 = vrot.lane.b32.xlu0 %v1023, 126
        %v1029 = vpop.permute.xlu0 %1028
        %v1032 = vadd.f32 %v1018, %v1027
        %v1033 = vadd.f32 %v1019, %v1029
        %s1034 = sld [smem:[#allocation6 + $0x30]]
        %v1035 = vstv %s1034
        %v1036 = vmul.f32 %v998, %v1035
        %v1037 = vmul.f32 %v999, %v1035
        %1040 = vrot.lane.b32.xlu0 %v1036, 125
        %v1041 = vpop.permute.xlu0 %1040
        %1042 = vrot.lane.b32.xlu0 %v1037, 125
        %v1043 = vpop.permute.xlu0 %1042
        %v1046 = vadd.f32 %v1032, %v1041
        %v1047 = vadd.f32 %v1033, %v1043
        %s1048 = sld [smem:[#allocation6 + $0x31]]
        %v1049 = vstv %s1048
        %v1050 = vmul.f32 %v998, %v1049
        %v1051 = vmul.f32 %v999, %v1049
        %1054 = vrot.lane.b32.xlu0 %v1050, 124
        %v1055 = vpop.permute.xlu0 %1054
        %1056 = vrot.lane.b32.xlu0 %v1051, 124
        %v1057 = vpop.permute.xlu0 %1056
        %v1060 = vadd.f32 %v1046, %v1055
        %v1061 = vadd.f32 %v1047, %v1057
        %s1062 = sld [smem:[#allocation7 + $0x1]]
        %v1063 = vstv %s1062
        %v1064 = vadd.f32 %v1060, %v1063
        %v1065 = vadd.f32 %v1061, %v1063
        %v1066 = vxor.u32 %v1064, 2147483648
        %v1067 = vxor.u32 %v1065, 2147483648
        %v1068 = vmul.f32 %v1066, 1.442695
        %v1069 = vpow.pop %v1068
        %v1070 = vmul.f32 %v1067, 1.442695
        %v1071 = vpow.pop %v1070
        %v1072 = vadd.f32 %v1069, 1.0
        %v1073 = vadd.f32 %v1071, 1.0
        %v1074 = vrcp.pop %v1072
        %v1075 = vmul.f32 1.0, %v1074
        %v1076 = vrcp.pop %v1073
        %v1077 = vmul.f32 1.0, %v1076
        %v1078 = vmul.f32 %v1064, %v1075
        %v1079 = vmul.f32 %v1065, %v1077
        %s1080 = scalar_lea.vmem %s154, 80 [#allocation11]
        %1081 = vst.msk [vmem:[%s1080] sm:$0xff] %vm219, %v1078
        %1082 = vst.msk [vmem:[%s1080 + $0x8] sm:$0xff] %vm219, %v1079
        %v1083 = vld [vmem:[%s342] sm:$0xff]
        %v1084 = vld [vmem:[%s342 + $0x8] sm:$0xff]
        %s1085 = sld [smem:[#allocation6 + $0x32]]
        %v1086 = vstv %s1085
        %v1087 = vmul.f32 %v1083, %v1086
        %v1088 = vmul.f32 %v1084, %v1086
        %v1089 = vadd.f32 %v1087, 0.0
        %v1090 = vadd.f32 %v1088, 0.0
        %s1091 = sld [smem:[#allocation6 + $0x33]]
        %v1092 = vstv %s1091
        %v1093 = vmul.f32 %v1083, %v1092
        %v1094 = vmul.f32 %v1084, %v1092
        %1097 = vrot.lane.b32.xlu0 %v1093, 127
        %v1098 = vpop.permute.xlu0 %1097
        %1099 = vrot.lane.b32.xlu0 %v1094, 127
        %v1100 = vpop.permute.xlu0 %1099
        %v1103 = vadd.f32 %v1089, %v1098
        %v1104 = vadd.f32 %v1090, %v1100
        %s1105 = sld [smem:[#allocation6 + $0x34]]
        %v1106 = vstv %s1105
        %v1107 = vmul.f32 %v1083, %v1106
        %v1108 = vmul.f32 %v1084, %v1106
        %1111 = vrot.lane.b32.xlu0 %v1107, 126
        %v1112 = vpop.permute.xlu0 %1111
        %1113 = vrot.lane.b32.xlu0 %v1108, 126
        %v1114 = vpop.permute.xlu0 %1113
        %v1117 = vadd.f32 %v1103, %v1112
        %v1118 = vadd.f32 %v1104, %v1114
        %s1119 = sld [smem:[#allocation6 + $0x35]]
        %v1120 = vstv %s1119
        %v1121 = vmul.f32 %v1083, %v1120
        %v1122 = vmul.f32 %v1084, %v1120
        %1125 = vrot.lane.b32.xlu0 %v1121, 125
        %v1126 = vpop.permute.xlu0 %1125
        %1127 = vrot.lane.b32.xlu0 %v1122, 125
        %v1128 = vpop.permute.xlu0 %1127
        %v1131 = vadd.f32 %v1117, %v1126
        %v1132 = vadd.f32 %v1118, %v1128
        %s1133 = sld [smem:[#allocation6 + $0x36]]
        %v1134 = vstv %s1133
        %v1135 = vmul.f32 %v1083, %v1134
        %v1136 = vmul.f32 %v1084, %v1134
        %1139 = vrot.lane.b32.xlu0 %v1135, 124
        %v1140 = vpop.permute.xlu0 %1139
        %1141 = vrot.lane.b32.xlu0 %v1136, 124
        %v1142 = vpop.permute.xlu0 %1141
        %v1145 = vadd.f32 %v1131, %v1140
        %v1146 = vadd.f32 %v1132, %v1142
        %v1147 = vld [vmem:[%s342 + $0x1] sm:$0xff]
        %v1148 = vld [vmem:[%s342 + $0x9] sm:$0xff]
        %s1149 = sld [smem:[#allocation6 + $0x37]]
        %v1150 = vstv %s1149
        %v1151 = vmul.f32 %v1147, %v1150
        %v1152 = vmul.f32 %v1148, %v1150
        %v1153 = vadd.f32 %v1145, %v1151
        %v1154 = vadd.f32 %v1146, %v1152
        %s1155 = sld [smem:[#allocation6 + $0x38]]
        %v1156 = vstv %s1155
        %v1157 = vmul.f32 %v1147, %v1156
        %v1158 = vmul.f32 %v1148, %v1156
        %1161 = vrot.lane.b32.xlu0 %v1157, 127
        %v1162 = vpop.permute.xlu0 %1161
        %1163 = vrot.lane.b32.xlu0 %v1158, 127
        %v1164 = vpop.permute.xlu0 %1163
        %v1167 = vadd.f32 %v1153, %v1162
        %v1168 = vadd.f32 %v1154, %v1164
        %s1169 = sld [smem:[#allocation6 + $0x39]]
        %v1170 = vstv %s1169
        %v1171 = vmul.f32 %v1147, %v1170
        %v1172 = vmul.f32 %v1148, %v1170
        %1175 = vrot.lane.b32.xlu0 %v1171, 126
        %v1176 = vpop.permute.xlu0 %1175
        %1177 = vrot.lane.b32.xlu0 %v1172, 126
        %v1178 = vpop.permute.xlu0 %1177
        %v1181 = vadd.f32 %v1167, %v1176
        %v1182 = vadd.f32 %v1168, %v1178
        %s1183 = sld [smem:[#allocation6 + $0x3a]]
        %v1184 = vstv %s1183
        %v1185 = vmul.f32 %v1147, %v1184
        %v1186 = vmul.f32 %v1148, %v1184
        %1189 = vrot.lane.b32.xlu0 %v1185, 125
        %v1190 = vpop.permute.xlu0 %1189
        %1191 = vrot.lane.b32.xlu0 %v1186, 125
        %v1192 = vpop.permute.xlu0 %1191
        %v1195 = vadd.f32 %v1181, %v1190
        %v1196 = vadd.f32 %v1182, %v1192
        %s1197 = sld [smem:[#allocation6 + $0x3b]]
        %v1198 = vstv %s1197
        %v1199 = vmul.f32 %v1147, %v1198
        %v1200 = vmul.f32 %v1148, %v1198
        %1203 = vrot.lane.b32.xlu0 %v1199, 124
        %v1204 = vpop.permute.xlu0 %1203
        %1205 = vrot.lane.b32.xlu0 %v1200, 124
        %v1206 = vpop.permute.xlu0 %1205
        %v1209 = vadd.f32 %v1195, %v1204
        %v1210 = vadd.f32 %v1196, %v1206
        %v1211 = vld [vmem:[%s342 + $0x2] sm:$0xff]
        %v1212 = vld [vmem:[%s342 + $0xa] sm:$0xff]
        %s1213 = sld [smem:[#allocation6 + $0x3c]]
        %v1214 = vstv %s1213
        %v1215 = vmul.f32 %v1211, %v1214
        %v1216 = vmul.f32 %v1212, %v1214
        %v1217 = vadd.f32 %v1209, %v1215
        %v1218 = vadd.f32 %v1210, %v1216
        %s1219 = sld [smem:[#allocation6 + $0x3d]]
        %v1220 = vstv %s1219
        %v1221 = vmul.f32 %v1211, %v1220
        %v1222 = vmul.f32 %v1212, %v1220
        %1225 = vrot.lane.b32.xlu0 %v1221, 127
        %v1226 = vpop.permute.xlu0 %1225
        %1227 = vrot.lane.b32.xlu0 %v1222, 127
        %v1228 = vpop.permute.xlu0 %1227
        %v1231 = vadd.f32 %v1217, %v1226
        %v1232 = vadd.f32 %v1218, %v1228
        %s1233 = sld [smem:[#allocation6 + $0x3e]]
        %v1234 = vstv %s1233
        %v1235 = vmul.f32 %v1211, %v1234
        %v1236 = vmul.f32 %v1212, %v1234
        %1239 = vrot.lane.b32.xlu0 %v1235, 126
        %v1240 = vpop.permute.xlu0 %1239
        %1241 = vrot.lane.b32.xlu0 %v1236, 126
        %v1242 = vpop.permute.xlu0 %1241
        %v1245 = vadd.f32 %v1231, %v1240
        %v1246 = vadd.f32 %v1232, %v1242
        %s1247 = sld [smem:[#allocation6 + $0x3f]]
        %v1248 = vstv %s1247
        %v1249 = vmul.f32 %v1211, %v1248
        %v1250 = vmul.f32 %v1212, %v1248
        %1253 = vrot.lane.b32.xlu0 %v1249, 125
        %v1254 = vpop.permute.xlu0 %1253
        %1255 = vrot.lane.b32.xlu0 %v1250, 125
        %v1256 = vpop.permute.xlu0 %1255
        %v1259 = vadd.f32 %v1245, %v1254
        %v1260 = vadd.f32 %v1246, %v1256
        %s1261 = sld [smem:[#allocation6 + $0x40]]
        %v1262 = vstv %s1261
        %v1263 = vmul.f32 %v1211, %v1262
        %v1264 = vmul.f32 %v1212, %v1262
        %1267 = vrot.lane.b32.xlu0 %v1263, 124
        %v1268 = vpop.permute.xlu0 %1267
        %1269 = vrot.lane.b32.xlu0 %v1264, 124
        %v1270 = vpop.permute.xlu0 %1269
        %v1273 = vadd.f32 %v1259, %v1268
        %v1274 = vadd.f32 %v1260, %v1270
        %v1275 = vld [vmem:[%s342 + $0x3] sm:$0xff]
        %v1276 = vld [vmem:[%s342 + $0xb] sm:$0xff]
        %s1277 = sld [smem:[#allocation6 + $0x41]]
        %v1278 = vstv %s1277
        %v1279 = vmul.f32 %v1275, %v1278
        %v1280 = vmul.f32 %v1276, %v1278
        %v1281 = vadd.f32 %v1273, %v1279
        %v1282 = vadd.f32 %v1274, %v1280
        %s1283 = sld [smem:[#allocation6 + $0x42]]
        %v1284 = vstv %s1283
        %v1285 = vmul.f32 %v1275, %v1284
        %v1286 = vmul.f32 %v1276, %v1284
        %1289 = vrot.lane.b32.xlu0 %v1285, 127
        %v1290 = vpop.permute.xlu0 %1289
        %1291 = vrot.lane.b32.xlu0 %v1286, 127
        %v1292 = vpop.permute.xlu0 %1291
        %v1295 = vadd.f32 %v1281, %v1290
        %v1296 = vadd.f32 %v1282, %v1292
        %s1297 = sld [smem:[#allocation6 + $0x43]]
        %v1298 = vstv %s1297
        %v1299 = vmul.f32 %v1275, %v1298
        %v1300 = vmul.f32 %v1276, %v1298
        %1303 = vrot.lane.b32.xlu0 %v1299, 126
        %v1304 = vpop.permute.xlu0 %1303
        %1305 = vrot.lane.b32.xlu0 %v1300, 126
        %v1306 = vpop.permute.xlu0 %1305
        %v1309 = vadd.f32 %v1295, %v1304
        %v1310 = vadd.f32 %v1296, %v1306
        %s1311 = sld [smem:[#allocation6 + $0x44]]
        %v1312 = vstv %s1311
        %v1313 = vmul.f32 %v1275, %v1312
        %v1314 = vmul.f32 %v1276, %v1312
        %1317 = vrot.lane.b32.xlu0 %v1313, 125
        %v1318 = vpop.permute.xlu0 %1317
        %1319 = vrot.lane.b32.xlu0 %v1314, 125
        %v1320 = vpop.permute.xlu0 %1319
        %v1323 = vadd.f32 %v1309, %v1318
        %v1324 = vadd.f32 %v1310, %v1320
        %s1325 = sld [smem:[#allocation6 + $0x45]]
        %v1326 = vstv %s1325
        %v1327 = vmul.f32 %v1275, %v1326
        %v1328 = vmul.f32 %v1276, %v1326
        %1331 = vrot.lane.b32.xlu0 %v1327, 124
        %v1332 = vpop.permute.xlu0 %1331
        %1333 = vrot.lane.b32.xlu0 %v1328, 124
        %v1334 = vpop.permute.xlu0 %1333
        %v1337 = vadd.f32 %v1323, %v1332
        %v1338 = vadd.f32 %v1324, %v1334
        %v1339 = vld [vmem:[%s342 + $0x4] sm:$0xff]
        %v1340 = vld [vmem:[%s342 + $0xc] sm:$0xff]
        %s1341 = sld [smem:[#allocation6 + $0x46]]
        %v1342 = vstv %s1341
        %v1343 = vmul.f32 %v1339, %v1342
        %v1344 = vmul.f32 %v1340, %v1342
        %v1345 = vadd.f32 %v1337, %v1343
        %v1346 = vadd.f32 %v1338, %v1344
        %s1347 = sld [smem:[#allocation6 + $0x47]]
        %v1348 = vstv %s1347
        %v1349 = vmul.f32 %v1339, %v1348
        %v1350 = vmul.f32 %v1340, %v1348
        %1353 = vrot.lane.b32.xlu0 %v1349, 127
        %v1354 = vpop.permute.xlu0 %1353
        %1355 = vrot.lane.b32.xlu0 %v1350, 127
        %v1356 = vpop.permute.xlu0 %1355
        %v1359 = vadd.f32 %v1345, %v1354
        %v1360 = vadd.f32 %v1346, %v1356
        %s1361 = sld [smem:[#allocation6 + $0x48]]
        %v1362 = vstv %s1361
        %v1363 = vmul.f32 %v1339, %v1362
        %v1364 = vmul.f32 %v1340, %v1362
        %1367 = vrot.lane.b32.xlu0 %v1363, 126
        %v1368 = vpop.permute.xlu0 %1367
        %1369 = vrot.lane.b32.xlu0 %v1364, 126
        %v1370 = vpop.permute.xlu0 %1369
        %v1373 = vadd.f32 %v1359, %v1368
        %v1374 = vadd.f32 %v1360, %v1370
        %s1375 = sld [smem:[#allocation6 + $0x49]]
        %v1376 = vstv %s1375
        %v1377 = vmul.f32 %v1339, %v1376
        %v1378 = vmul.f32 %v1340, %v1376
        %1381 = vrot.lane.b32.xlu0 %v1377, 125
        %v1382 = vpop.permute.xlu0 %1381
        %1383 = vrot.lane.b32.xlu0 %v1378, 125
        %v1384 = vpop.permute.xlu0 %1383
        %v1387 = vadd.f32 %v1373, %v1382
        %v1388 = vadd.f32 %v1374, %v1384
        %s1389 = sld [smem:[#allocation6 + $0x4a]]
        %v1390 = vstv %s1389
        %v1391 = vmul.f32 %v1339, %v1390
        %v1392 = vmul.f32 %v1340, %v1390
        %1395 = vrot.lane.b32.xlu0 %v1391, 124
        %v1396 = vpop.permute.xlu0 %1395
        %1397 = vrot.lane.b32.xlu0 %v1392, 124
        %v1398 = vpop.permute.xlu0 %1397
        %v1401 = vadd.f32 %v1387, %v1396
        %v1402 = vadd.f32 %v1388, %v1398
        %s1403 = sld [smem:[#allocation7 + $0x2]]
        %v1404 = vstv %s1403
        %v1405 = vadd.f32 %v1401, %v1404
        %v1406 = vadd.f32 %v1402, %v1404
        %v1407 = vxor.u32 %v1405, 2147483648
        %v1408 = vxor.u32 %v1406, 2147483648
        %v1409 = vmul.f32 %v1407, 1.442695
        %v1410 = vpow.pop %v1409
        %v1411 = vmul.f32 %v1408, 1.442695
        %v1412 = vpow.pop %v1411
        %v1413 = vadd.f32 %v1410, 1.0
        %v1414 = vadd.f32 %v1412, 1.0
        %v1415 = vrcp.pop %v1413
        %v1416 = vmul.f32 1.0, %v1415
        %v1417 = vrcp.pop %v1414
        %v1418 = vmul.f32 1.0, %v1417
        %v1419 = vmul.f32 %v1405, %v1416
        %v1420 = vmul.f32 %v1406, %v1418
        %s1421 = scalar_lea.vmem %s154, 96 [#allocation11]
        %1422 = vst.msk [vmem:[%s1421] sm:$0xff] %vm219, %v1419
        %1423 = vst.msk [vmem:[%s1421 + $0x8] sm:$0xff] %vm219, %v1420
        %v1424 = vld [vmem:[%s398] sm:$0xff]
        %v1425 = vld [vmem:[%s398 + $0x8] sm:$0xff]
        %s1426 = sld [smem:[#allocation6 + $0x4b]]
        %v1427 = vstv %s1426
        %v1428 = vmul.f32 %v1424, %v1427
        %v1429 = vmul.f32 %v1425, %v1427
        %v1430 = vadd.f32 %v1428, 0.0
        %v1431 = vadd.f32 %v1429, 0.0
        %s1432 = sld [smem:[#allocation6 + $0x4c]]
        %v1433 = vstv %s1432
        %v1434 = vmul.f32 %v1424, %v1433
        %v1435 = vmul.f32 %v1425, %v1433
        %1438 = vrot.lane.b32.xlu0 %v1434, 127
        %v1439 = vpop.permute.xlu0 %1438
        %1440 = vrot.lane.b32.xlu0 %v1435, 127
        %v1441 = vpop.permute.xlu0 %1440
        %v1444 = vadd.f32 %v1430, %v1439
        %v1445 = vadd.f32 %v1431, %v1441
        %s1446 = sld [smem:[#allocation6 + $0x4d]]
        %v1447 = vstv %s1446
        %v1448 = vmul.f32 %v1424, %v1447
        %v1449 = vmul.f32 %v1425, %v1447
        %1452 = vrot.lane.b32.xlu0 %v1448, 126
        %v1453 = vpop.permute.xlu0 %1452
        %1454 = vrot.lane.b32.xlu0 %v1449, 126
        %v1455 = vpop.permute.xlu0 %1454
        %v1458 = vadd.f32 %v1444, %v1453
        %v1459 = vadd.f32 %v1445, %v1455
        %s1460 = sld [smem:[#allocation6 + $0x4e]]
        %v1461 = vstv %s1460
        %v1462 = vmul.f32 %v1424, %v1461
        %v1463 = vmul.f32 %v1425, %v1461
        %1466 = vrot.lane.b32.xlu0 %v1462, 125
        %v1467 = vpop.permute.xlu0 %1466
        %1468 = vrot.lane.b32.xlu0 %v1463, 125
        %v1469 = vpop.permute.xlu0 %1468
        %v1472 = vadd.f32 %v1458, %v1467
        %v1473 = vadd.f32 %v1459, %v1469
        %s1474 = sld [smem:[#allocation6 + $0x4f]]
        %v1475 = vstv %s1474
        %v1476 = vmul.f32 %v1424, %v1475
        %v1477 = vmul.f32 %v1425, %v1475
        %1480 = vrot.lane.b32.xlu0 %v1476, 124
        %v1481 = vpop.permute.xlu0 %1480
        %1482 = vrot.lane.b32.xlu0 %v1477, 124
        %v1483 = vpop.permute.xlu0 %1482
        %v1486 = vadd.f32 %v1472, %v1481
        %v1487 = vadd.f32 %v1473, %v1483
        %v1488 = vld [vmem:[%s398 + $0x1] sm:$0xff]
        %v1489 = vld [vmem:[%s398 + $0x9] sm:$0xff]
        %s1490 = sld [smem:[#allocation6 + $0x50]]
        %v1491 = vstv %s1490
        %v1492 = vmul.f32 %v1488, %v1491
        %v1493 = vmul.f32 %v1489, %v1491
        %v1494 = vadd.f32 %v1486, %v1492
        %v1495 = vadd.f32 %v1487, %v1493
        %s1496 = sld [smem:[#allocation6 + $0x51]]
        %v1497 = vstv %s1496
        %v1498 = vmul.f32 %v1488, %v1497
        %v1499 = vmul.f32 %v1489, %v1497
        %1502 = vrot.lane.b32.xlu0 %v1498, 127
        %v1503 = vpop.permute.xlu0 %1502
        %1504 = vrot.lane.b32.xlu0 %v1499, 127
        %v1505 = vpop.permute.xlu0 %1504
        %v1508 = vadd.f32 %v1494, %v1503
        %v1509 = vadd.f32 %v1495, %v1505
        %s1510 = sld [smem:[#allocation6 + $0x52]]
        %v1511 = vstv %s1510
        %v1512 = vmul.f32 %v1488, %v1511
        %v1513 = vmul.f32 %v1489, %v1511
        %1516 = vrot.lane.b32.xlu0 %v1512, 126
        %v1517 = vpop.permute.xlu0 %1516
        %1518 = vrot.lane.b32.xlu0 %v1513, 126
        %v1519 = vpop.permute.xlu0 %1518
        %v1522 = vadd.f32 %v1508, %v1517
        %v1523 = vadd.f32 %v1509, %v1519
        %s1524 = sld [smem:[#allocation6 + $0x53]]
        %v1525 = vstv %s1524
        %v1526 = vmul.f32 %v1488, %v1525
        %v1527 = vmul.f32 %v1489, %v1525
        %1530 = vrot.lane.b32.xlu0 %v1526, 125
        %v1531 = vpop.permute.xlu0 %1530
        %1532 = vrot.lane.b32.xlu0 %v1527, 125
        %v1533 = vpop.permute.xlu0 %1532
        %v1536 = vadd.f32 %v1522, %v1531
        %v1537 = vadd.f32 %v1523, %v1533
        %s1538 = sld [smem:[#allocation6 + $0x54]]
        %v1539 = vstv %s1538
        %v1540 = vmul.f32 %v1488, %v1539
        %v1541 = vmul.f32 %v1489, %v1539
        %1544 = vrot.lane.b32.xlu0 %v1540, 124
        %v1545 = vpop.permute.xlu0 %1544
        %1546 = vrot.lane.b32.xlu0 %v1541, 124
        %v1547 = vpop.permute.xlu0 %1546
        %v1550 = vadd.f32 %v1536, %v1545
        %v1551 = vadd.f32 %v1537, %v1547
        %v1552 = vld [vmem:[%s398 + $0x2] sm:$0xff]
        %v1553 = vld [vmem:[%s398 + $0xa] sm:$0xff]
        %s1554 = sld [smem:[#allocation6 + $0x55]]
        %v1555 = vstv %s1554
        %v1556 = vmul.f32 %v1552, %v1555
        %v1557 = vmul.f32 %v1553, %v1555
        %v1558 = vadd.f32 %v1550, %v1556
        %v1559 = vadd.f32 %v1551, %v1557
        %s1560 = sld [smem:[#allocation6 + $0x56]]
        %v1561 = vstv %s1560
        %v1562 = vmul.f32 %v1552, %v1561
        %v1563 = vmul.f32 %v1553, %v1561
        %1566 = vrot.lane.b32.xlu0 %v1562, 127
        %v1567 = vpop.permute.xlu0 %1566
        %1568 = vrot.lane.b32.xlu0 %v1563, 127
        %v1569 = vpop.permute.xlu0 %1568
        %v1572 = vadd.f32 %v1558, %v1567
        %v1573 = vadd.f32 %v1559, %v1569
        %s1574 = sld [smem:[#allocation6 + $0x57]]
        %v1575 = vstv %s1574
        %v1576 = vmul.f32 %v1552, %v1575
        %v1577 = vmul.f32 %v1553, %v1575
        %1580 = vrot.lane.b32.xlu0 %v1576, 126
        %v1581 = vpop.permute.xlu0 %1580
        %1582 = vrot.lane.b32.xlu0 %v1577, 126
        %v1583 = vpop.permute.xlu0 %1582
        %v1586 = vadd.f32 %v1572, %v1581
        %v1587 = vadd.f32 %v1573, %v1583
        %s1588 = sld [smem:[#allocation6 + $0x58]]
        %v1589 = vstv %s1588
        %v1590 = vmul.f32 %v1552, %v1589
        %v1591 = vmul.f32 %v1553, %v1589
        %1594 = vrot.lane.b32.xlu0 %v1590, 125
        %v1595 = vpop.permute.xlu0 %1594
        %1596 = vrot.lane.b32.xlu0 %v1591, 125
        %v1597 = vpop.permute.xlu0 %1596
        %v1600 = vadd.f32 %v1586, %v1595
        %v1601 = vadd.f32 %v1587, %v1597
        %s1602 = sld [smem:[#allocation6 + $0x59]]
        %v1603 = vstv %s1602
        %v1604 = vmul.f32 %v1552, %v1603
        %v1605 = vmul.f32 %v1553, %v1603
        %1608 = vrot.lane.b32.xlu0 %v1604, 124
        %v1609 = vpop.permute.xlu0 %1608
        %1610 = vrot.lane.b32.xlu0 %v1605, 124
        %v1611 = vpop.permute.xlu0 %1610
        %v1614 = vadd.f32 %v1600, %v1609
        %v1615 = vadd.f32 %v1601, %v1611
        %v1616 = vld [vmem:[%s398 + $0x3] sm:$0xff]
        %v1617 = vld [vmem:[%s398 + $0xb] sm:$0xff]
        %s1618 = sld [smem:[#allocation6 + $0x5a]]
        %v1619 = vstv %s1618
        %v1620 = vmul.f32 %v1616, %v1619
        %v1621 = vmul.f32 %v1617, %v1619
        %v1622 = vadd.f32 %v1614, %v1620
        %v1623 = vadd.f32 %v1615, %v1621
        %s1624 = sld [smem:[#allocation6 + $0x5b]]
        %v1625 = vstv %s1624
        %v1626 = vmul.f32 %v1616, %v1625
        %v1627 = vmul.f32 %v1617, %v1625
        %1630 = vrot.lane.b32.xlu0 %v1626, 127
        %v1631 = vpop.permute.xlu0 %1630
        %1632 = vrot.lane.b32.xlu0 %v1627, 127
        %v1633 = vpop.permute.xlu0 %1632
        %v1636 = vadd.f32 %v1622, %v1631
        %v1637 = vadd.f32 %v1623, %v1633
        %s1638 = sld [smem:[#allocation6 + $0x5c]]
        %v1639 = vstv %s1638
        %v1640 = vmul.f32 %v1616, %v1639
        %v1641 = vmul.f32 %v1617, %v1639
        %1644 = vrot.lane.b32.xlu0 %v1640, 126
        %v1645 = vpop.permute.xlu0 %1644
        %1646 = vrot.lane.b32.xlu0 %v1641, 126
        %v1647 = vpop.permute.xlu0 %1646
        %v1650 = vadd.f32 %v1636, %v1645
        %v1651 = vadd.f32 %v1637, %v1647
        %s1652 = sld [smem:[#allocation6 + $0x5d]]
        %v1653 = vstv %s1652
        %v1654 = vmul.f32 %v1616, %v1653
        %v1655 = vmul.f32 %v1617, %v1653
        %1658 = vrot.lane.b32.xlu0 %v1654, 125
        %v1659 = vpop.permute.xlu0 %1658
        %1660 = vrot.lane.b32.xlu0 %v1655, 125
        %v1661 = vpop.permute.xlu0 %1660
        %v1664 = vadd.f32 %v1650, %v1659
        %v1665 = vadd.f32 %v1651, %v1661
        %s1666 = sld [smem:[#allocation6 + $0x5e]]
        %v1667 = vstv %s1666
        %v1668 = vmul.f32 %v1616, %v1667
        %v1669 = vmul.f32 %v1617, %v1667
        %1672 = vrot.lane.b32.xlu0 %v1668, 124
        %v1673 = vpop.permute.xlu0 %1672
        %1674 = vrot.lane.b32.xlu0 %v1669, 124
        %v1675 = vpop.permute.xlu0 %1674
        %v1678 = vadd.f32 %v1664, %v1673
        %v1679 = vadd.f32 %v1665, %v1675
        %v1680 = vld [vmem:[%s398 + $0x4] sm:$0xff]
        %v1681 = vld [vmem:[%s398 + $0xc] sm:$0xff]
        %s1682 = sld [smem:[#allocation6 + $0x5f]]
        %v1683 = vstv %s1682
        %v1684 = vmul.f32 %v1680, %v1683
        %v1685 = vmul.f32 %v1681, %v1683
        %v1686 = vadd.f32 %v1678, %v1684
        %v1687 = vadd.f32 %v1679, %v1685
        %s1688 = sld [smem:[#allocation6 + $0x60]]
        %v1689 = vstv %s1688
        %v1690 = vmul.f32 %v1680, %v1689
        %v1691 = vmul.f32 %v1681, %v1689
        %1694 = vrot.lane.b32.xlu0 %v1690, 127
        %v1695 = vpop.permute.xlu0 %1694
        %1696 = vrot.lane.b32.xlu0 %v1691, 127
        %v1697 = vpop.permute.xlu0 %1696
        %v1700 = vadd.f32 %v1686, %v1695
        %v1701 = vadd.f32 %v1687, %v1697
        %s1702 = sld [smem:[#allocation6 + $0x61]]
        %v1703 = vstv %s1702
        %v1704 = vmul.f32 %v1680, %v1703
        %v1705 = vmul.f32 %v1681, %v1703
        %1708 = vrot.lane.b32.xlu0 %v1704, 126
        %v1709 = vpop.permute.xlu0 %1708
        %1710 = vrot.lane.b32.xlu0 %v1705, 126
        %v1711 = vpop.permute.xlu0 %1710
        %v1714 = vadd.f32 %v1700, %v1709
        %v1715 = vadd.f32 %v1701, %v1711
        %s1716 = sld [smem:[#allocation6 + $0x62]]
        %v1717 = vstv %s1716
        %v1718 = vmul.f32 %v1680, %v1717
        %v1719 = vmul.f32 %v1681, %v1717
        %1722 = vrot.lane.b32.xlu0 %v1718, 125
        %v1723 = vpop.permute.xlu0 %1722
        %1724 = vrot.lane.b32.xlu0 %v1719, 125
        %v1725 = vpop.permute.xlu0 %1724
        %v1728 = vadd.f32 %v1714, %v1723
        %v1729 = vadd.f32 %v1715, %v1725
        %s1730 = sld [smem:[#allocation6 + $0x63]]
        %v1731 = vstv %s1730
        %v1732 = vmul.f32 %v1680, %v1731
        %v1733 = vmul.f32 %v1681, %v1731
        %1736 = vrot.lane.b32.xlu0 %v1732, 124
        %v1737 = vpop.permute.xlu0 %1736
        %1738 = vrot.lane.b32.xlu0 %v1733, 124
        %v1739 = vpop.permute.xlu0 %1738
        %v1742 = vadd.f32 %v1728, %v1737
        %v1743 = vadd.f32 %v1729, %v1739
        %s1744 = sld [smem:[#allocation7 + $0x3]]
        %v1745 = vstv %s1744
        %v1746 = vadd.f32 %v1742, %v1745
        %v1747 = vadd.f32 %v1743, %v1745
        %v1748 = vxor.u32 %v1746, 2147483648
        %v1749 = vxor.u32 %v1747, 2147483648
        %v1750 = vmul.f32 %v1748, 1.442695
        %v1751 = vpow.pop %v1750
        %v1752 = vmul.f32 %v1749, 1.442695
        %v1753 = vpow.pop %v1752
        %v1754 = vadd.f32 %v1751, 1.0
        %v1755 = vadd.f32 %v1753, 1.0
        %v1756 = vrcp.pop %v1754
        %v1757 = vmul.f32 1.0, %v1756
        %v1758 = vrcp.pop %v1755
        %v1759 = vmul.f32 1.0, %v1758
        %v1760 = vmul.f32 %v1746, %v1757
        %v1761 = vmul.f32 %v1747, %v1759
        %s1762 = scalar_lea.vmem %s154, 112 [#allocation11]
        %1763 = vst.msk [vmem:[%s1762] sm:$0xff] %vm219, %v1760
        %1764 = vst.msk [vmem:[%s1762 + $0x8] sm:$0xff] %vm219, %v1761
        %s1765 = sand.u32 %s72, 1
        %s1766 = scalar_lea.sflag [#allocation10], %s1765
        %s1767 = sand.u32 %s72, 1
        %s1768 = smul.addr %s1767, 128
        %s1769 = scalar_lea.vmem [#allocation11], %s1768
        // Predicated region
        $region29: #{tpu_custom_call.1} parent=23 // pred_check
          %p1770 = pneg %p82
        $region30: #{tpu_custom_call.1} parent=23 // pred_check_branch
          %1772 = sbr.rel (%p1770) target = $region32
        $region31: #{tpu_custom_call.1} parent=23 // pred_region
          %s1774 = ssub.s32 2048, 2048
          %1775 = vsyncadd %s1766, %s1774
          %s1776 = smul.addr %s38, 16
          %s1777 = smul.addr %s1776, 128
          %s1778 = scalar_lea.hbm %s5, %s1777
          %s1779 = sshll.u32 %s1769, 4
          %s1780 = int_to_ptr.vmem [resolvable:$true] %s1779
          %1785 = dma.vmem_to_hbm [thread:$0]  %s1780, 2048, %s1778, %s1766, 128, 128, 8
        $region32: #{tpu_custom_call.1} parent=23 // pred_fallthru
          _
      $region24: #{tpu_custom_call.1} parent=5 // pred_fallthru
        _
      %p1786 = scmp.le.s32.totalorder 2, %s33
      // Predicated region
      $region33: #{tpu_custom_call.1} parent=5 // pred_check
        %p1787 = pneg %p1786
      $region34: #{tpu_custom_call.1} parent=5 // pred_check_branch
        %1789 = sbr.rel (%p1787) target = $region36
      $region35: #{tpu_custom_call.1} parent=5 // pred_region
        %s1790 = ssub.s32 %s33, 2
        // Predicated region
        $region37: #{tpu_custom_call.1} parent=35 // pred_check
          %p1791 = pneg %p88
        $region38: #{tpu_custom_call.1} parent=35 // pred_check_branch
          %1793 = sbr.rel (%p1791) target = $region40
        $region39: #{tpu_custom_call.1} parent=35 // pred_region
          %s1794 = sand.u32 %s73, 1
          %s1795 = scalar_lea.sflag [#allocation10], %s1794
          %s1796 = sand.u32 %s73, 1
          %s1797 = smul.addr %s1796, 128
          %s1798 = scalar_lea.vmem [#allocation11], %s1797
          %1799 = dma.done %s1795, 2048
        $region40: #{tpu_custom_call.1} parent=35 // pred_fallthru
          _
      $region36: #{tpu_custom_call.1} parent=5 // pred_fallthru
        _
    $region6: #{tpu_custom_call.1} parent=1 // loop_footer
      %s37 = sadd.s32 1, %s33
    $region7: #{tpu_custom_call.1} parent=1 // loop_footer_branch
      %32 = sbr.rel target = $region3
    $region8: #{tpu_custom_call.1} parent=1 // loop_exit
      _
    %1800 = vsyncpa [#allocation9], 1
    %s1801 = scalar_lea.sflag [#allocation9], 1
    %1802 = vsyncpa %s1801, 1
    %1803 = vsyncpa [#allocation10], 1
    %s1804 = scalar_lea.sflag [#allocation10], 1
    %1805 = vsyncpa %s1804, 1

</llo_original>
